<compile_context>
chip_gen: v6e
topology: v6e:2x2x1
jax: 0.10.0
libtpu: 0.0.40
codegen_flags: <defaults>
</compile_context>

<pallas_src>
import math
from functools import partial

import jax
import jax.numpy as jnp
from jax import lax
from jax.experimental import pallas as pl
from jax.experimental.pallas import tpu as pltpu


# ---------------------------------------------------------------------------
# Fused kernel: embeddings + 2 GatedGCN layers + linear head
# ---------------------------------------------------------------------------
#
# Packed-parameter layout (H = hidden dim):
#   w_ref  (H, 12H) bf16 : [emb_h_w_pad | L1(wa wd wb we wc) | L2(wa wd wb we wc) | lin1_w_pad]
#   bias4  (2, 4H)  f32  : per-layer [ba | bd | bb | be]
#   vecs   (14, H)  f32  : 0 emb_h_b, 1 emb_e_w, 2 emb_e_b,
#                          3..7  L1 (bc, gamma_h, beta_h, gamma_e, beta_e),
#                          8..12 L2 (bc, gamma_h, beta_h, gamma_e, beta_e),
#                          13 lin1_b_pad

def _gated_gcn_fused_kernel(x_ref, e_sn_ref, snorm_n_ref, inc_ref, dst_t_ref,
                            w_ref, bias4_ref, vecs_ref, y_ref):
    f32 = jnp.float32
    bf16 = jnp.bfloat16
    N, H = x_ref.shape
    E = dst_t_ref.shape[1]

    def mm(a, b):
        # bf16 x bf16 MXU matmul with f32 accumulation (weights already bf16)
        return jnp.dot(a.astype(bf16), b.astype(bf16), preferred_element_type=f32)

    # --- unpack graph tensors (all VMEM-resident, static slices) ---
    src_oh = inc_ref[0:E, :]          # (E, N) bf16 one-hot rows (exact in bf16)
    dst_oh = inc_ref[E:2 * E, :]      # (E, N)
    dst_t = dst_t_ref[...]            # (N, E) pre-transposed scatter incidence
    snorm_n = snorm_n_ref[...]        # (N, 1)
    e_raw = e_sn_ref[:, 0:1]          # (E, 1)
    snorm_e = e_sn_ref[:, 1:2]        # (E, 1)

    # --- embeddings ---
    # embedding_h: x / weight rows beyond in_dim are zero-padded, so this is a
    # lane-aligned (N,H)@(H,H) matmul on the packed weight slab.
    h = mm(x_ref[...], w_ref[:, 0:H]) + vecs_ref[0:1, :]          # (N, H) f32
    # embedding_e has K=1: an outer-product broadcast on the VPU, not the MXU.
    e = e_raw * vecs_ref[1:2, :] + vecs_ref[2:3, :]               # (E, H) f32

    def batch_norm(v, gamma, beta):
        # BatchNorm1d training-mode batch stats (biased variance), eps=1e-5.
        inv_n = 1.0 / v.shape[0]
        mean = jnp.sum(v, axis=0, keepdims=True) * inv_n
        ex2 = jnp.sum(v * v, axis=0, keepdims=True) * inv_n
        var = jnp.maximum(ex2 - mean * mean, 0.0)   # guard single-pass cancellation
        return (v - mean) * lax.rsqrt(var + 1e-5) * gamma + beta

    def gated_gcn_layer(h_in, e_in, w_off, bias_row, vec_off):
        # Fused node projections [Ah | Dh | Bh | Eh]: one (N,H)@(H,4H) MXU pass.
        proj = (mm(h_in, w_ref[:, w_off:w_off + 4 * H])
                + bias4_ref[bias_row:bias_row + 1, :])            # (N, 4H)
        Ce = (mm(e_in, w_ref[:, w_off + 4 * H:w_off + 5 * H])
              + vecs_ref[vec_off:vec_off + 1, :])                 # (E, H)
        Ah = proj[:, 0:H]
        DB = proj[:, H:3 * H]          # [Dh | Bh] -> fused source-gather operand
        Eh = proj[:, 3 * H:4 * H]

        # message_func: gather Dh/Bh at src (fused) and Eh at dst via one-hot matmuls.
        DB_src = mm(src_oh, DB)        # (E, 2H) = [Dh_src | Bh_src]
        Eh_dst = mm(dst_oh, Eh)        # (E, H)
        e_new = Ce + DB_src[:, 0:H] + Eh_dst

        # reduce_func: gated mean over incoming edges.
        sigma = jnp.clip(jax.nn.sigmoid(e_new), 0.0001, 1.0 - 0.0001)
        payload = jnp.concatenate([sigma * DB_src[:, H:2 * H], sigma], axis=-1)  # (E, 2H)
        # Scatter-sum via the pre-transposed incidence: standard last-dim
        # contraction, bf16 operands, f32 accumulation; numerator and
        # denominator come out of a single MXU pass.
        agg = mm(dst_t, payload)       # (N, 2H)
        num = agg[:, 0:H]
        den = agg[:, H:2 * H]
        # den >= in_degree * 1e-4, so the max() only shields 0-in-degree nodes
        # (which DGL's reduce never visits) from NaN.
        h_new = Ah + num * pl.reciprocal(jnp.maximum(den, 1e-6), approx=True)

        # graph-size norm, BatchNorm, ReLU, residual
        h_new = batch_norm(h_new * snorm_n,
                           vecs_ref[vec_off + 1:vec_off + 2, :],
                           vecs_ref[vec_off + 2:vec_off + 3, :])
        e_out = batch_norm(e_new * snorm_e,
                           vecs_ref[vec_off + 3:vec_off + 4, :],
                           vecs_ref[vec_off + 4:vec_off + 5, :])
        h_new = jnp.maximum(h_new, 0.0)
        e_out = jnp.maximum(e_out, 0.0)
        return h_in + h_new, e_in + e_out

    h1, e1 = gated_gcn_layer(h, e, H, 0, 3)
    h2, _ = gated_gcn_layer(h1, e1, 6 * H, 1, 8)

    # linear_dropout was constructed with p=0.0 -> identity.
    # TODO(synk): training-mode dropout (p > 0) not implemented.
    # Head: lane-dense (H-wide zero-padded) output; sliced to out_dim in wrapper.
    y_ref[...] = mm(h2, w_ref[:, 11 * H:12 * H]) + vecs_ref[13:14, :]


# ---------------------------------------------------------------------------
# pallas_call wrapper (single fused launch)
# ---------------------------------------------------------------------------

_VMEM = pl.BlockSpec(memory_space=pltpu.MemorySpace.VMEM)
_COMPILER_PARAMS = pltpu.CompilerParams(vmem_limit_bytes=32 * 1024 * 1024)


@partial(jax.jit, static_argnames=("out_dim",))
def gated_gcn_forward(packed, node_inputs, e_sn, snorm_n, inc, dst_oh_t, *, out_dim):
    N = node_inputs.shape[0]
    H = packed["w_big"].shape[0]
    # inputs.contiguous().view(N, -1), zero-padded to H lanes so embedding_h
    # reads a lane-aligned slice of the packed weight slab.
    x = node_inputs.reshape(N, -1)
    x_pad = jnp.zeros((N, H), jnp.float32).at[:, :x.shape[1]].set(x)

    args = (x_pad, e_sn, snorm_n, inc, dst_oh_t,
            packed["w_big"], packed["bias4"], packed["vecs"])
    y_pad = pl.pallas_call(
        _gated_gcn_fused_kernel,
        out_shape=jax.ShapeDtypeStruct((N, H), jnp.float32),
        in_specs=[_VMEM] * len(args),
        out_specs=_VMEM,
        compiler_params=_COMPILER_PARAMS,
    )(*args)
    return y_pad[:, :out_dim]


# ---------------------------------------------------------------------------
# Parameter init (mirrors nn.Module shapes) + host-side packing
# ---------------------------------------------------------------------------

def _init_linear(key, in_dim, out_dim):
    kw, kb = jax.random.split(key)
    scale = 1.0 / math.sqrt(max(in_dim, 1))
    # stored pre-transposed: (in, out); bias as (1, out) for 2D broadcasting
    w = jax.random.normal(kw, (in_dim, out_dim), jnp.float32) * scale
    b = jax.random.normal(kb, (1, out_dim), jnp.float32) * 0.01
    return w, b


def _init_gcn_layer(key, dim):
    keys = jax.random.split(key, 5)
    p = {}
    for name, k in zip("abcde", keys):
        w, b = _init_linear(k, dim, dim)
        p[f"w{name}"] = w
        p[f"b{name}"] = b
    p["gamma_h"] = jnp.ones((1, dim), jnp.float32)
    p["beta_h"] = jnp.zeros((1, dim), jnp.float32)
    p["gamma_e"] = jnp.ones((1, dim), jnp.float32)
    p["beta_e"] = jnp.zeros((1, dim), jnp.float32)
    return p


def init_params(key, input_dim, hidden_dim, output_dim):
    k1, k2, k3, k4, k5 = jax.random.split(key, 5)
    emb_h_w, emb_h_b = _init_linear(k1, input_dim, hidden_dim)
    emb_e_w, emb_e_b = _init_linear(k2, 1, hidden_dim)
    lin1_w, lin1_b = _init_linear(k5, hidden_dim, output_dim)
    return {
        "emb_h_w": emb_h_w, "emb_h_b": emb_h_b,
        "emb_e_w": emb_e_w, "emb_e_b": emb_e_b,
        "layer1": _init_gcn_layer(k3, hidden_dim),
        "layer2": _init_gcn_layer(k4, hidden_dim),
        "lin1_w": lin1_w, "lin1_b": lin1_b,
    }


def pack_params(params, hidden_dim):
    """Pack ~28 small tensors into 3 slabs (done once, host-side)."""
    H = hidden_dim
    f32, bf16 = jnp.float32, jnp.bfloat16

    def pad_rows(w, rows):
        return jnp.zeros((rows, w.shape[1]), f32).at[:w.shape[0], :].set(w)

    def pad_cols(w, cols):
        return jnp.zeros((w.shape[0], cols), f32).at[:, :w.shape[1]].set(w)

    emb_h_w_pad = pad_rows(params["emb_h_w"], H)      # (H, H), zero rows >= in_dim
    lin1_w_pad = pad_cols(params["lin1_w"], H)        # (H, H), zero cols >= out_dim
    lin1_b_pad = pad_cols(params["lin1_b"], H)        # (1, H)

    def layer_w(p):                                    # (H, 5H): [wa wd wb we wc]
        return jnp.concatenate([p["wa"], p["wd"], p["wb"], p["we"], p["wc"]], axis=1)

    w_big = jnp.concatenate(
        [emb_h_w_pad, layer_w(params["layer1"]),
         layer_w(params["layer2"]), lin1_w_pad], axis=1).astype(bf16)   # (H, 12H) bf16

    def layer_bias4(p):                                # (1, 4H): [ba bd bb be]
        return jnp.concatenate([p["ba"], p["bd"], p["bb"], p["be"]], axis=1)

    bias4 = jnp.concatenate([layer_bias4(params["layer1"]),
                             layer_bias4(params["layer2"])], axis=0)    # (2, 4H) f32

    def layer_vecs(p):
        return [p["bc"], p["gamma_h"], p["beta_h"], p["gamma_e"], p["beta_e"]]

    vecs = jnp.concatenate(
        [params["emb_h_b"], params["emb_e_w"], params["emb_e_b"]]
        + layer_vecs(params["layer1"]) + layer_vecs(params["layer2"])
        + [lin1_b_pad], axis=0)                                         # (14, H) f32

    return {"w_big": w_big, "bias4": bias4, "vecs": vecs}


# ---------------------------------------------------------------------------
# Demo
# ---------------------------------------------------------------------------

if __name__ == "__main__":
    key = jax.random.PRNGKey(0)

    # Small, deterministic problem (hidden dim chosen lane-dense = 128)
    N = 32                # nodes
    input_dim = 16        # flattened node input dim (nodes given as (N, 4, 4))
    hidden_dim = 128
    output_dim = 8

    # Bidirectional ring graph: every node has in-degree 2 (matches DGL's
    # update_all semantics since no node has zero in-degree).  E is a multiple
    # of 8 so the stacked incidence slab slices on sublane boundaries.
    idx = jnp.arange(N, dtype=jnp.int32)
    src = jnp.concatenate([idx, idx])
    dst = jnp.concatenate([(idx + 1) % N, (idx - 1) % N])
    E = int(src.shape[0])  # 64

    # Incidence matrices in bf16 (0/1 exact in bf16).  The scatter uses a
    # pre-transposed (N, E) copy, so no transpose is materialized in-kernel.
    src_oh = jax.nn.one_hot(src, N, dtype=jnp.bfloat16)   # (E, N)
    dst_oh = jax.nn.one_hot(dst, N, dtype=jnp.bfloat16)   # (E, N)
    dst_oh_t = jnp.transpose(dst_oh)                      # (N, E)
    inc = jnp.concatenate([src_oh, dst_oh], axis=0)       # (2E, N)

    k_in, k_e, k_p = jax.random.split(key, 3)
    node_inputs = jax.random.normal(k_in, (N, 4, 4), jnp.float32)
    edge_feats = jax.random.normal(k_e, (E, 1), jnp.float32)
    snorm_n = jnp.full((N, 1), 1.0 / math.sqrt(N), jnp.float32)
    snorm_e = jnp.full((E, 1), 1.0 / math.sqrt(E), jnp.float32)
    e_sn = jnp.concatenate([edge_feats, snorm_e], axis=1)  # (E, 2)

    params = init_params(k_p, input_dim, hidden_dim, output_dim)
    packed = pack_params(params, hidden_dim)

    y = gated_gcn_forward(packed, node_inputs, e_sn, snorm_n, inc, dst_oh_t,
                          out_dim=output_dim)
    y = jax.block_until_ready(y)
    assert y.shape == (N, output_dim)
    assert bool(jnp.all(jnp.isfinite(y)))
    print("KERNEL_OK")
</pallas_src>

<mosaic_0001>
module attributes {stable_mosaic.version = 11 : i64} {
  func.func @_gated_gcn_fused_kernel(%arg0: memref<32x128xf32, #tpu.memory_space<vmem>>, %arg1: memref<64x2xf32, #tpu.memory_space<vmem>>, %arg2: memref<32x1xf32, #tpu.memory_space<vmem>>, %arg3: memref<128x32xbf16, #tpu.memory_space<vmem>>, %arg4: memref<32x64xbf16, #tpu.memory_space<vmem>>, %arg5: memref<128x1536xbf16, #tpu.memory_space<vmem>>, %arg6: memref<2x512xf32, #tpu.memory_space<vmem>>, %arg7: memref<14x128xf32, #tpu.memory_space<vmem>>, %arg8: memref<32x128xf32, #tpu.memory_space<vmem>>) attributes {dimension_semantics = [], scalar_prefetch = 0 : i64, scratch_operands = 0 : i64, tpu.core_type = #tpu.core_type<tc>} {
    %c0 = arith.constant 0 : index
    %c0_0 = arith.constant 0 : index
    %0 = vector.load %arg3[%c0, %c0_0] : memref<128x32xbf16, #tpu.memory_space<vmem>>, vector<64x32xbf16>
    %c64 = arith.constant 64 : index
    %c0_1 = arith.constant 0 : index
    %1 = vector.load %arg3[%c64, %c0_1] : memref<128x32xbf16, #tpu.memory_space<vmem>>, vector<64x32xbf16>
    %c0_2 = arith.constant 0 : index
    %c0_3 = arith.constant 0 : index
    %2 = vector.load %arg4[%c0_2, %c0_3] : memref<32x64xbf16, #tpu.memory_space<vmem>>, vector<32x64xbf16>
    %c0_4 = arith.constant 0 : index
    %c0_5 = arith.constant 0 : index
    %3 = vector.load %arg2[%c0_4, %c0_5] : memref<32x1xf32, #tpu.memory_space<vmem>>, vector<32x1xf32>
    %c0_6 = arith.constant 0 : index
    %c0_7 = arith.constant 0 : index
    %4 = vector.load %arg1[%c0_6, %c0_7] : memref<64x2xf32, #tpu.memory_space<vmem>>, vector<64x1xf32>
    %c0_8 = arith.constant 0 : index
    %c1 = arith.constant 1 : index
    %5 = vector.load %arg1[%c0_8, %c1] : memref<64x2xf32, #tpu.memory_space<vmem>>, vector<64x1xf32>
    %c0_9 = arith.constant 0 : index
    %c0_10 = arith.constant 0 : index
    %6 = vector.load %arg0[%c0_9, %c0_10] : memref<32x128xf32, #tpu.memory_space<vmem>>, vector<32x128xf32>
    %c0_11 = arith.constant 0 : index
    %c0_12 = arith.constant 0 : index
    %7 = vector.load %arg5[%c0_11, %c0_12] : memref<128x1536xbf16, #tpu.memory_space<vmem>>, vector<128x128xbf16>
    %8 = arith.truncf %6 : vector<32x128xf32> to vector<32x128xbf16>
    %cst = arith.constant dense<0.000000e+00> : vector<32x128xf32>
    %9 = tpu.matmul %8, %7, %cst {dimension_numbers = #tpu.dot_dimension_numbers<[1], [0], [0], [1], [0, 0, 1, 1], [], []>} : vector<32x128xbf16>, vector<128x128xbf16>, vector<32x128xf32> -> vector<32x128xf32>
    %c0_13 = arith.constant 0 : index
    %c0_14 = arith.constant 0 : index
    %10 = vector.load %arg7[%c0_13, %c0_14] : memref<14x128xf32, #tpu.memory_space<vmem>>, vector<1x128xf32>
    %11 = vector.broadcast %10 : vector<1x128xf32> to vector<32x128xf32>
    %12 = arith.addf %9, %11 : vector<32x128xf32>
    %c1_15 = arith.constant 1 : index
    %c0_16 = arith.constant 0 : index
    %13 = vector.load %arg7[%c1_15, %c0_16] : memref<14x128xf32, #tpu.memory_space<vmem>>, vector<1x128xf32>
    %14 = vector.broadcast %4 : vector<64x1xf32> to vector<64x128xf32>
    %15 = vector.broadcast %13 : vector<1x128xf32> to vector<64x128xf32>
    %16 = arith.mulf %14, %15 : vector<64x128xf32>
    %c2 = arith.constant 2 : index
    %c0_17 = arith.constant 0 : index
    %17 = vector.load %arg7[%c2, %c0_17] : memref<14x128xf32, #tpu.memory_space<vmem>>, vector<1x128xf32>
    %18 = vector.broadcast %17 : vector<1x128xf32> to vector<64x128xf32>
    %19 = arith.addf %16, %18 : vector<64x128xf32>
    %c0_18 = arith.constant 0 : index
    %c128 = arith.constant 128 : index
    %20 = vector.load %arg5[%c0_18, %c128] : memref<128x1536xbf16, #tpu.memory_space<vmem>>, vector<128x512xbf16>
    %21 = arith.truncf %12 : vector<32x128xf32> to vector<32x128xbf16>
    %cst_19 = arith.constant dense<0.000000e+00> : vector<32x512xf32>
    %22 = tpu.matmul %21, %20, %cst_19 {dimension_numbers = #tpu.dot_dimension_numbers<[1], [0], [0], [1], [0, 0, 1, 1], [], []>} : vector<32x128xbf16>, vector<128x512xbf16>, vector<32x512xf32> -> vector<32x512xf32>
    %c0_20 = arith.constant 0 : index
    %c0_21 = arith.constant 0 : index
    %23 = vector.load %arg6[%c0_20, %c0_21] : memref<2x512xf32, #tpu.memory_space<vmem>>, vector<1x512xf32>
    %24 = vector.broadcast %23 : vector<1x512xf32> to vector<32x512xf32>
    %25 = arith.addf %22, %24 : vector<32x512xf32>
    %c0_22 = arith.constant 0 : index
    %c640 = arith.constant 640 : index
    %26 = vector.load %arg5[%c0_22, %c640] : memref<128x1536xbf16, #tpu.memory_space<vmem>>, vector<128x128xbf16>
    %27 = arith.truncf %19 : vector<64x128xf32> to vector<64x128xbf16>
    %cst_23 = arith.constant dense<0.000000e+00> : vector<64x128xf32>
    %28 = tpu.matmul %27, %26, %cst_23 {dimension_numbers = #tpu.dot_dimension_numbers<[1], [0], [0], [1], [0, 0, 1, 1], [], []>} : vector<64x128xbf16>, vector<128x128xbf16>, vector<64x128xf32> -> vector<64x128xf32>
    %c3 = arith.constant 3 : index
    %c0_24 = arith.constant 0 : index
    %29 = vector.load %arg7[%c3, %c0_24] : memref<14x128xf32, #tpu.memory_space<vmem>>, vector<1x128xf32>
    %30 = vector.broadcast %29 : vector<1x128xf32> to vector<64x128xf32>
    %31 = arith.addf %28, %30 : vector<64x128xf32>
    %32 = vector.extract_strided_slice %25 {offsets = [0, 0], sizes = [32, 128], strides = [1, 1]} : vector<32x512xf32> to vector<32x128xf32>
    %33 = vector.extract_strided_slice %25 {offsets = [0, 128], sizes = [32, 256], strides = [1, 1]} : vector<32x512xf32> to vector<32x256xf32>
    %34 = vector.extract_strided_slice %25 {offsets = [0, 384], sizes = [32, 128], strides = [1, 1]} : vector<32x512xf32> to vector<32x128xf32>
    %35 = arith.truncf %33 : vector<32x256xf32> to vector<32x256xbf16>
    %cst_25 = arith.constant dense<0.000000e+00> : vector<64x256xf32>
    %36 = tpu.matmul %0, %35, %cst_25 {dimension_numbers = #tpu.dot_dimension_numbers<[1], [0], [0], [1], [0, 0, 1, 1], [], []>} : vector<64x32xbf16>, vector<32x256xbf16>, vector<64x256xf32> -> vector<64x256xf32>
    %37 = arith.truncf %34 : vector<32x128xf32> to vector<32x128xbf16>
    %cst_26 = arith.constant dense<0.000000e+00> : vector<64x128xf32>
    %38 = tpu.matmul %1, %37, %cst_26 {dimension_numbers = #tpu.dot_dimension_numbers<[1], [0], [0], [1], [0, 0, 1, 1], [], []>} : vector<64x32xbf16>, vector<32x128xbf16>, vector<64x128xf32> -> vector<64x128xf32>
    %39 = vector.extract_strided_slice %36 {offsets = [0, 0], sizes = [64, 128], strides = [1, 1]} : vector<64x256xf32> to vector<64x128xf32>
    %40 = arith.addf %31, %39 : vector<64x128xf32>
    %41 = arith.addf %40, %38 : vector<64x128xf32>
    %42 = arith.negf %41 : vector<64x128xf32>
    %43 = math.exp %42 : vector<64x128xf32>
    %cst_27 = arith.constant 1.000000e+00 : f32
    %44 = vector.broadcast %cst_27 : f32 to vector<64x128xf32>
    %45 = arith.addf %44, %43 : vector<64x128xf32>
    %46 = arith.divf %44, %45 : vector<64x128xf32>
    %cst_28 = arith.constant 9.99999974E-5 : f32
    %cst_29 = arith.constant 0.999899983 : f32
    %47 = vector.broadcast %cst_28 : f32 to vector<64x128xf32>
    %48 = arith.maximumf %47, %46 : vector<64x128xf32>
    %49 = vector.broadcast %cst_29 : f32 to vector<64x128xf32>
    %50 = arith.minimumf %49, %48 : vector<64x128xf32>
    %51 = vector.extract_strided_slice %36 {offsets = [0, 128], sizes = [64, 128], strides = [1, 1]} : vector<64x256xf32> to vector<64x128xf32>
    %52 = arith.mulf %50, %51 : vector<64x128xf32>
    %53 = tpu.concatenate %52, %50 in 1 : vector<64x128xf32>, vector<64x128xf32> -> vector<64x256xf32>
    %54 = arith.truncf %53 : vector<64x256xf32> to vector<64x256xbf16>
    %cst_30 = arith.constant dense<0.000000e+00> : vector<32x256xf32>
    %55 = tpu.matmul %2, %54, %cst_30 {dimension_numbers = #tpu.dot_dimension_numbers<[1], [0], [0], [1], [0, 0, 1, 1], [], []>} : vector<32x64xbf16>, vector<64x256xbf16>, vector<32x256xf32> -> vector<32x256xf32>
    %56 = vector.extract_strided_slice %55 {offsets = [0, 0], sizes = [32, 128], strides = [1, 1]} : vector<32x256xf32> to vector<32x128xf32>
    %57 = vector.extract_strided_slice %55 {offsets = [0, 128], sizes = [32, 128], strides = [1, 1]} : vector<32x256xf32> to vector<32x128xf32>
    %cst_31 = arith.constant 9.99999997E-7 : f32
    %58 = vector.broadcast %cst_31 : f32 to vector<32x128xf32>
    %59 = arith.maximumf %57, %58 : vector<32x128xf32>
    %60 = tpu.reciprocal %59 {approx = true} : vector<32x128xf32> -> vector<32x128xf32>
    %61 = arith.mulf %56, %60 : vector<32x128xf32>
    %62 = arith.addf %32, %61 : vector<32x128xf32>
    %63 = vector.broadcast %3 : vector<32x1xf32> to vector<32x128xf32>
    %64 = arith.mulf %62, %63 : vector<32x128xf32>
    %c4 = arith.constant 4 : index
    %c0_32 = arith.constant 0 : index
    %65 = vector.load %arg7[%c4, %c0_32] : memref<14x128xf32, #tpu.memory_space<vmem>>, vector<1x128xf32>
    %c5 = arith.constant 5 : index
    %c0_33 = arith.constant 0 : index
    %66 = vector.load %arg7[%c5, %c0_33] : memref<14x128xf32, #tpu.memory_space<vmem>>, vector<1x128xf32>
    %cst_34 = arith.constant dense<0.000000e+00> : vector<128xf32>
    %67 = vector.multi_reduction <add>, %64, %cst_34 [0] : vector<32x128xf32> to vector<128xf32>
    %68 = vector.shape_cast %67 : vector<128xf32> to vector<1x128xf32>
    %cst_35 = arith.constant 3.125000e-02 : f32
    %69 = vector.broadcast %cst_35 : f32 to vector<1x128xf32>
    %70 = arith.mulf %68, %69 : vector<1x128xf32>
    %71 = arith.mulf %64, %64 : vector<32x128xf32>
    %cst_36 = arith.constant dense<0.000000e+00> : vector<128xf32>
    %72 = vector.multi_reduction <add>, %71, %cst_36 [0] : vector<32x128xf32> to vector<128xf32>
    %73 = vector.shape_cast %72 : vector<128xf32> to vector<1x128xf32>
    %cst_37 = arith.constant 3.125000e-02 : f32
    %74 = vector.broadcast %cst_37 : f32 to vector<1x128xf32>
    %75 = arith.mulf %73, %74 : vector<1x128xf32>
    %76 = arith.mulf %70, %70 : vector<1x128xf32>
    %77 = arith.subf %75, %76 : vector<1x128xf32>
    %cst_38 = arith.constant 0.000000e+00 : f32
    %78 = vector.broadcast %cst_38 : f32 to vector<1x128xf32>
    %79 = arith.maximumf %77, %78 : vector<1x128xf32>
    %80 = vector.broadcast %70 : vector<1x128xf32> to vector<32x128xf32>
    %81 = arith.subf %64, %80 : vector<32x128xf32>
    %cst_39 = arith.constant 9.99999974E-6 : f32
    %82 = vector.broadcast %cst_39 : f32 to vector<1x128xf32>
    %83 = arith.addf %79, %82 : vector<1x128xf32>
    %84 = math.rsqrt %83 : vector<1x128xf32>
    %85 = vector.broadcast %84 : vector<1x128xf32> to vector<32x128xf32>
    %86 = arith.mulf %81, %85 : vector<32x128xf32>
    %87 = vector.broadcast %65 : vector<1x128xf32> to vector<32x128xf32>
    %88 = arith.mulf %86, %87 : vector<32x128xf32>
    %89 = vector.broadcast %66 : vector<1x128xf32> to vector<32x128xf32>
    %90 = arith.addf %88, %89 : vector<32x128xf32>
    %91 = vector.broadcast %5 : vector<64x1xf32> to vector<64x128xf32>
    %92 = arith.mulf %41, %91 : vector<64x128xf32>
    %c6 = arith.constant 6 : index
    %c0_40 = arith.constant 0 : index
    %93 = vector.load %arg7[%c6, %c0_40] : memref<14x128xf32, #tpu.memory_space<vmem>>, vector<1x128xf32>
    %c7 = arith.constant 7 : index
    %c0_41 = arith.constant 0 : index
    %94 = vector.load %arg7[%c7, %c0_41] : memref<14x128xf32, #tpu.memory_space<vmem>>, vector<1x128xf32>
    %cst_42 = arith.constant dense<0.000000e+00> : vector<128xf32>
    %95 = vector.multi_reduction <add>, %92, %cst_42 [0] : vector<64x128xf32> to vector<128xf32>
    %96 = vector.shape_cast %95 : vector<128xf32> to vector<1x128xf32>
    %cst_43 = arith.constant 1.562500e-02 : f32
    %97 = vector.broadcast %cst_43 : f32 to vector<1x128xf32>
    %98 = arith.mulf %96, %97 : vector<1x128xf32>
    %99 = arith.mulf %92, %92 : vector<64x128xf32>
    %cst_44 = arith.constant dense<0.000000e+00> : vector<128xf32>
    %100 = vector.multi_reduction <add>, %99, %cst_44 [0] : vector<64x128xf32> to vector<128xf32>
    %101 = vector.shape_cast %100 : vector<128xf32> to vector<1x128xf32>
    %cst_45 = arith.constant 1.562500e-02 : f32
    %102 = vector.broadcast %cst_45 : f32 to vector<1x128xf32>
    %103 = arith.mulf %101, %102 : vector<1x128xf32>
    %104 = arith.mulf %98, %98 : vector<1x128xf32>
    %105 = arith.subf %103, %104 : vector<1x128xf32>
    %cst_46 = arith.constant 0.000000e+00 : f32
    %106 = vector.broadcast %cst_46 : f32 to vector<1x128xf32>
    %107 = arith.maximumf %105, %106 : vector<1x128xf32>
    %108 = vector.broadcast %98 : vector<1x128xf32> to vector<64x128xf32>
    %109 = arith.subf %92, %108 : vector<64x128xf32>
    %cst_47 = arith.constant 9.99999974E-6 : f32
    %110 = vector.broadcast %cst_47 : f32 to vector<1x128xf32>
    %111 = arith.addf %107, %110 : vector<1x128xf32>
    %112 = math.rsqrt %111 : vector<1x128xf32>
    %113 = vector.broadcast %112 : vector<1x128xf32> to vector<64x128xf32>
    %114 = arith.mulf %109, %113 : vector<64x128xf32>
    %115 = vector.broadcast %93 : vector<1x128xf32> to vector<64x128xf32>
    %116 = arith.mulf %114, %115 : vector<64x128xf32>
    %117 = vector.broadcast %94 : vector<1x128xf32> to vector<64x128xf32>
    %118 = arith.addf %116, %117 : vector<64x128xf32>
    %cst_48 = arith.constant 0.000000e+00 : f32
    %119 = vector.broadcast %cst_48 : f32 to vector<32x128xf32>
    %120 = arith.maximumf %90, %119 : vector<32x128xf32>
    %cst_49 = arith.constant 0.000000e+00 : f32
    %121 = vector.broadcast %cst_49 : f32 to vector<64x128xf32>
    %122 = arith.maximumf %118, %121 : vector<64x128xf32>
    %123 = arith.addf %12, %120 : vector<32x128xf32>
    %124 = arith.addf %19, %122 : vector<64x128xf32>
    %c0_50 = arith.constant 0 : index
    %c768 = arith.constant 768 : index
    %125 = vector.load %arg5[%c0_50, %c768] : memref<128x1536xbf16, #tpu.memory_space<vmem>>, vector<128x512xbf16>
    %126 = arith.truncf %123 : vector<32x128xf32> to vector<32x128xbf16>
    %cst_51 = arith.constant dense<0.000000e+00> : vector<32x512xf32>
    %127 = tpu.matmul %126, %125, %cst_51 {dimension_numbers = #tpu.dot_dimension_numbers<[1], [0], [0], [1], [0, 0, 1, 1], [], []>} : vector<32x128xbf16>, vector<128x512xbf16>, vector<32x512xf32> -> vector<32x512xf32>
    %c1_52 = arith.constant 1 : index
    %c0_53 = arith.constant 0 : index
    %128 = vector.load %arg6[%c1_52, %c0_53] : memref<2x512xf32, #tpu.memory_space<vmem>>, vector<1x512xf32>
    %129 = vector.broadcast %128 : vector<1x512xf32> to vector<32x512xf32>
    %130 = arith.addf %127, %129 : vector<32x512xf32>
    %c0_54 = arith.constant 0 : index
    %c1280 = arith.constant 1280 : index
    %131 = vector.load %arg5[%c0_54, %c1280] : memref<128x1536xbf16, #tpu.memory_space<vmem>>, vector<128x128xbf16>
    %132 = arith.truncf %124 : vector<64x128xf32> to vector<64x128xbf16>
    %cst_55 = arith.constant dense<0.000000e+00> : vector<64x128xf32>
    %133 = tpu.matmul %132, %131, %cst_55 {dimension_numbers = #tpu.dot_dimension_numbers<[1], [0], [0], [1], [0, 0, 1, 1], [], []>} : vector<64x128xbf16>, vector<128x128xbf16>, vector<64x128xf32> -> vector<64x128xf32>
    %c8 = arith.constant 8 : index
    %c0_56 = arith.constant 0 : index
    %134 = vector.load %arg7[%c8, %c0_56] : memref<14x128xf32, #tpu.memory_space<vmem>>, vector<1x128xf32>
    %135 = vector.broadcast %134 : vector<1x128xf32> to vector<64x128xf32>
    %136 = arith.addf %133, %135 : vector<64x128xf32>
    %137 = vector.extract_strided_slice %130 {offsets = [0, 0], sizes = [32, 128], strides = [1, 1]} : vector<32x512xf32> to vector<32x128xf32>
    %138 = vector.extract_strided_slice %130 {offsets = [0, 128], sizes = [32, 256], strides = [1, 1]} : vector<32x512xf32> to vector<32x256xf32>
    %139 = vector.extract_strided_slice %130 {offsets = [0, 384], sizes = [32, 128], strides = [1, 1]} : vector<32x512xf32> to vector<32x128xf32>
    %140 = arith.truncf %138 : vector<32x256xf32> to vector<32x256xbf16>
    %cst_57 = arith.constant dense<0.000000e+00> : vector<64x256xf32>
    %141 = tpu.matmul %0, %140, %cst_57 {dimension_numbers = #tpu.dot_dimension_numbers<[1], [0], [0], [1], [0, 0, 1, 1], [], []>} : vector<64x32xbf16>, vector<32x256xbf16>, vector<64x256xf32> -> vector<64x256xf32>
    %142 = arith.truncf %139 : vector<32x128xf32> to vector<32x128xbf16>
    %cst_58 = arith.constant dense<0.000000e+00> : vector<64x128xf32>
    %143 = tpu.matmul %1, %142, %cst_58 {dimension_numbers = #tpu.dot_dimension_numbers<[1], [0], [0], [1], [0, 0, 1, 1], [], []>} : vector<64x32xbf16>, vector<32x128xbf16>, vector<64x128xf32> -> vector<64x128xf32>
    %144 = vector.extract_strided_slice %141 {offsets = [0, 0], sizes = [64, 128], strides = [1, 1]} : vector<64x256xf32> to vector<64x128xf32>
    %145 = arith.addf %136, %144 : vector<64x128xf32>
    %146 = arith.addf %145, %143 : vector<64x128xf32>
    %147 = arith.negf %146 : vector<64x128xf32>
    %148 = math.exp %147 : vector<64x128xf32>
    %cst_59 = arith.constant 1.000000e+00 : f32
    %149 = vector.broadcast %cst_59 : f32 to vector<64x128xf32>
    %150 = arith.addf %149, %148 : vector<64x128xf32>
    %151 = arith.divf %149, %150 : vector<64x128xf32>
    %cst_60 = arith.constant 9.99999974E-5 : f32
    %cst_61 = arith.constant 0.999899983 : f32
    %152 = vector.broadcast %cst_60 : f32 to vector<64x128xf32>
    %153 = arith.maximumf %152, %151 : vector<64x128xf32>
    %154 = vector.broadcast %cst_61 : f32 to vector<64x128xf32>
    %155 = arith.minimumf %154, %153 : vector<64x128xf32>
    %156 = vector.extract_strided_slice %141 {offsets = [0, 128], sizes = [64, 128], strides = [1, 1]} : vector<64x256xf32> to vector<64x128xf32>
    %157 = arith.mulf %155, %156 : vector<64x128xf32>
    %158 = tpu.concatenate %157, %155 in 1 : vector<64x128xf32>, vector<64x128xf32> -> vector<64x256xf32>
    %159 = arith.truncf %158 : vector<64x256xf32> to vector<64x256xbf16>
    %cst_62 = arith.constant dense<0.000000e+00> : vector<32x256xf32>
    %160 = tpu.matmul %2, %159, %cst_62 {dimension_numbers = #tpu.dot_dimension_numbers<[1], [0], [0], [1], [0, 0, 1, 1], [], []>} : vector<32x64xbf16>, vector<64x256xbf16>, vector<32x256xf32> -> vector<32x256xf32>
    %161 = vector.extract_strided_slice %160 {offsets = [0, 0], sizes = [32, 128], strides = [1, 1]} : vector<32x256xf32> to vector<32x128xf32>
    %162 = vector.extract_strided_slice %160 {offsets = [0, 128], sizes = [32, 128], strides = [1, 1]} : vector<32x256xf32> to vector<32x128xf32>
    %cst_63 = arith.constant 9.99999997E-7 : f32
    %163 = vector.broadcast %cst_63 : f32 to vector<32x128xf32>
    %164 = arith.maximumf %162, %163 : vector<32x128xf32>
    %165 = tpu.reciprocal %164 {approx = true} : vector<32x128xf32> -> vector<32x128xf32>
    %166 = arith.mulf %161, %165 : vector<32x128xf32>
    %167 = arith.addf %137, %166 : vector<32x128xf32>
    %168 = vector.broadcast %3 : vector<32x1xf32> to vector<32x128xf32>
    %169 = arith.mulf %167, %168 : vector<32x128xf32>
    %c9 = arith.constant 9 : index
    %c0_64 = arith.constant 0 : index
    %170 = vector.load %arg7[%c9, %c0_64] : memref<14x128xf32, #tpu.memory_space<vmem>>, vector<1x128xf32>
    %c10 = arith.constant 10 : index
    %c0_65 = arith.constant 0 : index
    %171 = vector.load %arg7[%c10, %c0_65] : memref<14x128xf32, #tpu.memory_space<vmem>>, vector<1x128xf32>
    %cst_66 = arith.constant dense<0.000000e+00> : vector<128xf32>
    %172 = vector.multi_reduction <add>, %169, %cst_66 [0] : vector<32x128xf32> to vector<128xf32>
    %173 = vector.shape_cast %172 : vector<128xf32> to vector<1x128xf32>
    %cst_67 = arith.constant 3.125000e-02 : f32
    %174 = vector.broadcast %cst_67 : f32 to vector<1x128xf32>
    %175 = arith.mulf %173, %174 : vector<1x128xf32>
    %176 = arith.mulf %169, %169 : vector<32x128xf32>
    %cst_68 = arith.constant dense<0.000000e+00> : vector<128xf32>
    %177 = vector.multi_reduction <add>, %176, %cst_68 [0] : vector<32x128xf32> to vector<128xf32>
    %178 = vector.shape_cast %177 : vector<128xf32> to vector<1x128xf32>
    %cst_69 = arith.constant 3.125000e-02 : f32
    %179 = vector.broadcast %cst_69 : f32 to vector<1x128xf32>
    %180 = arith.mulf %178, %179 : vector<1x128xf32>
    %181 = arith.mulf %175, %175 : vector<1x128xf32>
    %182 = arith.subf %180, %181 : vector<1x128xf32>
    %cst_70 = arith.constant 0.000000e+00 : f32
    %183 = vector.broadcast %cst_70 : f32 to vector<1x128xf32>
    %184 = arith.maximumf %182, %183 : vector<1x128xf32>
    %185 = vector.broadcast %175 : vector<1x128xf32> to vector<32x128xf32>
    %186 = arith.subf %169, %185 : vector<32x128xf32>
    %cst_71 = arith.constant 9.99999974E-6 : f32
    %187 = vector.broadcast %cst_71 : f32 to vector<1x128xf32>
    %188 = arith.addf %184, %187 : vector<1x128xf32>
    %189 = math.rsqrt %188 : vector<1x128xf32>
    %190 = vector.broadcast %189 : vector<1x128xf32> to vector<32x128xf32>
    %191 = arith.mulf %186, %190 : vector<32x128xf32>
    %192 = vector.broadcast %170 : vector<1x128xf32> to vector<32x128xf32>
    %193 = arith.mulf %191, %192 : vector<32x128xf32>
    %194 = vector.broadcast %171 : vector<1x128xf32> to vector<32x128xf32>
    %195 = arith.addf %193, %194 : vector<32x128xf32>
    %cst_72 = arith.constant 0.000000e+00 : f32
    %196 = vector.broadcast %cst_72 : f32 to vector<32x128xf32>
    %197 = arith.maximumf %195, %196 : vector<32x128xf32>
    %198 = arith.addf %123, %197 : vector<32x128xf32>
    %c0_73 = arith.constant 0 : index
    %c1408 = arith.constant 1408 : index
    %199 = vector.load %arg5[%c0_73, %c1408] : memref<128x1536xbf16, #tpu.memory_space<vmem>>, vector<128x128xbf16>
    %200 = arith.truncf %198 : vector<32x128xf32> to vector<32x128xbf16>
    %cst_74 = arith.constant dense<0.000000e+00> : vector<32x128xf32>
    %201 = tpu.matmul %200, %199, %cst_74 {dimension_numbers = #tpu.dot_dimension_numbers<[1], [0], [0], [1], [0, 0, 1, 1], [], []>} : vector<32x128xbf16>, vector<128x128xbf16>, vector<32x128xf32> -> vector<32x128xf32>
    %c13 = arith.constant 13 : index
    %c0_75 = arith.constant 0 : index
    %202 = vector.load %arg7[%c13, %c0_75] : memref<14x128xf32, #tpu.memory_space<vmem>>, vector<1x128xf32>
    %203 = vector.broadcast %202 : vector<1x128xf32> to vector<32x128xf32>
    %204 = arith.addf %201, %203 : vector<32x128xf32>
    %c0_76 = arith.constant 0 : index
    %c0_77 = arith.constant 0 : index
    %205 = vector.load %arg8[%c0_76, %c0_77] : memref<32x128xf32, #tpu.memory_space<vmem>>, vector<32x128xf32>
    tpu.vector_store %arg8[%c0_76, %c0_77], %204 {strides = array<i32>} : memref<32x128xf32, #tpu.memory_space<vmem>>, vector<32x128xf32>,
    return
  }
}

</mosaic_0001>

<llo_original>
// kernel: gated_gcn_forward.1
$region0: #{gated_gcn_forward.1}
  #allocation0 [shape = 'u32[]', space=smem, size = 0x4, offset = 0x4, fixed_abs, tag = 'smem constant byte address 0x4 - core index']
  #allocation1 [shape = 'u32[144,128]{1,0:T(1,128)}', space=vmem, size = 0x12000, scoped, tag = 'internal scratch']
  %s0 = inlined_call_operand.vmem [shape: f32[32,128], index: 0, kind: input, shape index: {}]
  %s1 = inlined_call_operand.vmem [shape: f32[64,2], index: 1, kind: input, shape index: {}]
  %s2 = inlined_call_operand.vmem [shape: f32[32,1], index: 2, kind: input, shape index: {}]
  %s3 = inlined_call_operand.vmem [shape: bf16[128,32], index: 3, kind: input, shape index: {}]
  %s4 = inlined_call_operand.vmem [shape: bf16[32,64], index: 4, kind: input, shape index: {}]
  %s5 = inlined_call_operand.hbm [shape: bf16[128,1536], index: 5, kind: input, shape index: {}]
  %s6 = inlined_call_operand.vmem [shape: f32[2,512], index: 6, kind: input, shape index: {}]
  %s7 = inlined_call_operand.vmem [shape: f32[14,128], index: 7, kind: input, shape index: {}]
  %s8 = inlined_call_operand.vmem [shape: f32[32,128], index: 8, kind: output, shape index: {}]
  %s9 = sld [smem:[#allocation0]]
  $region46: #{gated_gcn_forward.1} parent=0
    _
  %s11 = ssub.s32 1, %s9
  %s12 = scalar_select 0, %s11, %s9
  $region1: #{gated_gcn_forward.1} parent=0
    #allocation2 [shape = 'u8[393216]{0}', space=vmem, size = 0x60000, scoped, tag = 'input window, operand 5, single buffered']
    #allocation3 [shape = 's32[1]{0}', space=sflag, size = 0x4, scoped, tag = 'scoped memory for gated_gcn_forward.1']
    %13 = vsyncpa [#allocation3], 0
    // Predicated region
    $region2: #{gated_gcn_forward.1} parent=1 // pred_check
      _
    $region3: #{gated_gcn_forward.1} parent=1 // pred_check_branch
      %15 = sbr.rel (0) target = $region5
    $region4: #{gated_gcn_forward.1} parent=1 // pred_region
      _
    $region5: #{gated_gcn_forward.1} parent=1 // pred_fallthru
      _
    // Predicated region
    $region6: #{gated_gcn_forward.1} parent=1 // pred_check
      _
    $region7: #{gated_gcn_forward.1} parent=1 // pred_check_branch
      %17 = sbr.rel (0) target = $region9
    $region8: #{gated_gcn_forward.1} parent=1 // pred_region
      _
    $region9: #{gated_gcn_forward.1} parent=1 // pred_fallthru
      _
    // Predicated region
    $region10: #{gated_gcn_forward.1} parent=1 // pred_check
      _
    $region11: #{gated_gcn_forward.1} parent=1 // pred_check_branch
      %19 = sbr.rel (0) target = $region13
    $region12: #{gated_gcn_forward.1} parent=1 // pred_region
      _
    $region13: #{gated_gcn_forward.1} parent=1 // pred_fallthru
      _
    // Predicated region
    $region14: #{gated_gcn_forward.1} parent=1 // pred_check
      _
    $region15: #{gated_gcn_forward.1} parent=1 // pred_check_branch
      %21 = sbr.rel (0) target = $region17
    $region16: #{gated_gcn_forward.1} parent=1 // pred_region
      _
    $region17: #{gated_gcn_forward.1} parent=1 // pred_fallthru
      _
    // Predicated region
    $region18: #{gated_gcn_forward.1} parent=1 // pred_check
      _
    $region19: #{gated_gcn_forward.1} parent=1 // pred_check_branch
      %23 = sbr.rel (0) target = $region21
    $region20: #{gated_gcn_forward.1} parent=1 // pred_region
      _
    $region21: #{gated_gcn_forward.1} parent=1 // pred_fallthru
      _
    // Predicated region
    $region22: #{gated_gcn_forward.1} parent=1 // pred_check
      _
    $region23: #{gated_gcn_forward.1} parent=1 // pred_check_branch
      %25 = sbr.rel (0) target = $region25
    $region24: #{gated_gcn_forward.1} parent=1 // pred_region
      %s27 = ssub.s32 12288, 12288
      %28 = vsyncadd [#allocation3], %s27
      %s29 = sshll.u32 [#allocation2], 4
      %s30 = int_to_ptr.vmem [resolvable:$true] %s29
      %35 = dma.hbm_to_vmem [thread:$0]  %s5, 12288, %s30, [#allocation3], 768, 768, 48
    $region25: #{gated_gcn_forward.1} parent=1 // pred_fallthru
      _
    // Predicated region
    $region26: #{gated_gcn_forward.1} parent=1 // pred_check
      _
    $region27: #{gated_gcn_forward.1} parent=1 // pred_check_branch
      %37 = sbr.rel (0) target = $region29
    $region28: #{gated_gcn_forward.1} parent=1 // pred_region
      _
    $region29: #{gated_gcn_forward.1} parent=1 // pred_fallthru
      _
    // Predicated region
    $region30: #{gated_gcn_forward.1} parent=1 // pred_check
      _
    $region31: #{gated_gcn_forward.1} parent=1 // pred_check_branch
      %39 = sbr.rel (0) target = $region33
    $region32: #{gated_gcn_forward.1} parent=1 // pred_region
      _
    $region33: #{gated_gcn_forward.1} parent=1 // pred_fallthru
      _
    // Predicated region
    $region34: #{gated_gcn_forward.1} parent=1 // pred_check
      _
    $region35: #{gated_gcn_forward.1} parent=1 // pred_check_branch
      %41 = sbr.rel (0) target = $region37
    $region36: #{gated_gcn_forward.1} parent=1 // pred_region
      %42 = dma.done [#allocation3], 12288
    $region37: #{gated_gcn_forward.1} parent=1 // pred_fallthru
      _
    %v44 = vld [vmem:[%s3] sm:$0xf]
    %v45 = vld [vmem:[%s3 + $0x4] sm:$0xf]
    %v46 = vld [vmem:[%s3 + $0x8] sm:$0xf]
    %v47 = vld [vmem:[%s3 + $0xc] sm:$0xf]
    %v48 = vld [vmem:[%s3 + $0x10] sm:$0xf]
    %v49 = vld [vmem:[%s3 + $0x14] sm:$0xf]
    %v50 = vld [vmem:[%s3 + $0x18] sm:$0xf]
    %v51 = vld [vmem:[%s3 + $0x1c] sm:$0xf]
    %v52 = vld [vmem:[%s3 + $0x20] sm:$0xf]
    %v53 = vld [vmem:[%s3 + $0x24] sm:$0xf]
    %v54 = vld [vmem:[%s3 + $0x28] sm:$0xf]
    %v55 = vld [vmem:[%s3 + $0x2c] sm:$0xf]
    %v56 = vld [vmem:[%s3 + $0x30] sm:$0xf]
    %v57 = vld [vmem:[%s3 + $0x34] sm:$0xf]
    %v58 = vld [vmem:[%s3 + $0x38] sm:$0xf]
    %v59 = vld [vmem:[%s3 + $0x3c] sm:$0xf]
    %v60 = vld [vmem:[%s4] sm:$0xf]
    %v61 = vld [vmem:[%s4 + $0x4] sm:$0xf]
    %v62 = vld [vmem:[%s4 + $0x8] sm:$0xf]
    %v63 = vld [vmem:[%s4 + $0xc] sm:$0xf]
    %v64 = vld [vmem:[%s2] sm:$0xff]
    %v65 = vld [vmem:[%s2 + $0x8] sm:$0xff]
    %v66 = vld [vmem:[%s2 + $0x10] sm:$0xff]
    %v67 = vld [vmem:[%s2 + $0x18] sm:$0xff]
    %v68 = vld [vmem:[%s1] sm:$0xff]
    %v69 = vld [vmem:[%s1 + $0x8] sm:$0xff]
    %v70 = vld [vmem:[%s1 + $0x10] sm:$0xff]
    %v71 = vld [vmem:[%s1 + $0x18] sm:$0xff]
    %v72 = vld [vmem:[%s1 + $0x20] sm:$0xff]
    %v73 = vld [vmem:[%s1 + $0x28] sm:$0xff]
    %v74 = vld [vmem:[%s1 + $0x30] sm:$0xff]
    %v75 = vld [vmem:[%s1 + $0x38] sm:$0xff]
    %v76 = vld [vmem:[%s0] sm:$0xff]
    %v77 = vld [vmem:[%s0 + $0x8] sm:$0xff]
    %v78 = vld [vmem:[%s0 + $0x10] sm:$0xff]
    %v79 = vld [vmem:[%s0 + $0x18] sm:$0xff]
    %v80 = vld [vmem:[#allocation2] sm:$0xf]
    %v81 = vld [vmem:[#allocation2 + $0x30] sm:$0xf]
    %v82 = vld [vmem:[#allocation2 + $0x60] sm:$0xf]
    %v83 = vld [vmem:[#allocation2 + $0x90] sm:$0xf]
    %v84 = vld [vmem:[#allocation2 + $0xc0] sm:$0xf]
    %v85 = vld [vmem:[#allocation2 + $0xf0] sm:$0xf]
    %v86 = vld [vmem:[#allocation2 + $0x120] sm:$0xf]
    %v87 = vld [vmem:[#allocation2 + $0x150] sm:$0xf]
    %v88 = vld [vmem:[#allocation2 + $0x180] sm:$0xf]
    %v89 = vld [vmem:[#allocation2 + $0x1b0] sm:$0xf]
    %v90 = vld [vmem:[#allocation2 + $0x1e0] sm:$0xf]
    %v91 = vld [vmem:[#allocation2 + $0x210] sm:$0xf]
    %v92 = vld [vmem:[#allocation2 + $0x240] sm:$0xf]
    %v93 = vld [vmem:[#allocation2 + $0x270] sm:$0xf]
    %v94 = vld [vmem:[#allocation2 + $0x2a0] sm:$0xf]
    %v95 = vld [vmem:[#allocation2 + $0x2d0] sm:$0xf]
    %v96 = vpack.c.bf16 %v77, %v76
    %v97 = vpack.c.bf16 %v79, %v78
    %v98 = vld [vmem:[%s7] sm:$0x1]
    %v99 = vlaneseq
    %v100 = vshrl.u32 %v99, 7
    %v101 = vsub.s32 0, %v100
    %v102 = vrot.slane %v98, %v101
    %v119 = vunpack.c.l.b16 %v80
    %v120 = vunpack.c.l.b16 %v81
    %v121 = vunpack.c.l.b16 %v82
    %v122 = vunpack.c.l.b16 %v83
    %v123 = vunpack.c.l.b16 %v84
    %v124 = vunpack.c.l.b16 %v85
    %v125 = vunpack.c.l.b16 %v86
    %v126 = vunpack.c.l.b16 %v87
    %v127 = vunpack.c.l.b16 %v88
    %v128 = vunpack.c.l.b16 %v89
    %v129 = vunpack.c.l.b16 %v90
    %v130 = vunpack.c.l.b16 %v91
    %v131 = vunpack.c.l.b16 %v92
    %v132 = vunpack.c.l.b16 %v93
    %v133 = vunpack.c.l.b16 %v94
    %v134 = vunpack.c.l.b16 %v95
    %v135 = vpack.c.b16 %v120, %v119
    %v136 = vpack.c.b16 %v122, %v121
    %v137 = vpack.c.b16 %v124, %v123
    %v138 = vpack.c.b16 %v126, %v125
    %v139 = vpack.c.b16 %v128, %v127
    %v140 = vpack.c.b16 %v130, %v129
    %v141 = vpack.c.b16 %v132, %v131
    %v142 = vpack.c.b16 %v134, %v133
    %151 = vmatprep.subr.bf16.mxu0 0
    %152 = vmatpush1.bf16.msra.mxu0 %v142
    %153 = vmatprep.subr.bf16.mxu0 0
    %154 = vmatpush1.bf16.msra.mxu0 %v141
    %155 = vmatprep.subr.bf16.mxu0 0
    %156 = vmatpush1.bf16.msra.mxu0 %v140
    %157 = vmatprep.subr.bf16.mxu0 0
    %158 = vmatpush1.bf16.msra.mxu0 %v139
    %159 = vmatprep.subr.bf16.mxu0 0
    %160 = vmatpush1.bf16.msra.mxu0 %v138
    %161 = vmatprep.subr.bf16.mxu0 0
    %162 = vmatpush1.bf16.msra.mxu0 %v137
    %163 = vmatprep.subr.bf16.mxu0 0
    %164 = vmatpush1.bf16.msra.mxu0 %v136
    %165 = vmatprep.subr.bf16.mxu0 0
    %166 = vmatpush1.bf16.msra.mxu0 %v135
    %167 = vmatprep.subr.bf16.mxu0 0
    %168 = vmatpush2.bf16.msra.mxu0 0
    %169 = vmatprep.subr.bf16.mxu0 0
    %170 = vmatpush2.bf16.msra.mxu0 0
    %171 = vmatprep.subr.bf16.mxu0 0
    %172 = vmatpush2.bf16.msra.mxu0 0
    %173 = vmatprep.subr.bf16.mxu0 0
    %174 = vmatpush2.bf16.msra.mxu0 0
    %175 = vmatprep.subr.bf16.mxu0 0
    %176 = vmatpush2.bf16.msra.mxu0 0
    %177 = vmatprep.subr.bf16.mxu0 0
    %178 = vmatpush2.bf16.msra.mxu0 0
    %179 = vmatprep.subr.bf16.mxu0 0
    %180 = vmatpush2.bf16.msra.mxu0 0
    %181 = vmatprep.subr.bf16.mxu0 0
    %182 = vmatpush2.bf16.msra.mxu0 0
    %183 = vmatprep.mubr.bf16.mxu0 0
    %184 = vmatmul.mubr.bf16.gmra.mxu0 %v96
    %v185 = vpop.f32.mrf.mxu0
    %v186 = vadd.f32 %v102, %v185
    %v187 = vpop.f32.mrf.mxu0
    %v188 = vpop.f32.mrf.mxu0
    %v189 = vadd.f32 %v102, %v188
    %v190 = vpop.f32.mrf.mxu0
    %191 = vmatprep.mubr.bf16.mxu0 0
    %192 = vmatmul.mubr.bf16.gmra.mxu0 %v97
    %v193 = vpop.f32.mrf.mxu0
    %v194 = vadd.f32 %v102, %v193
    %v195 = vpop.f32.mrf.mxu0
    %v196 = vpop.f32.mrf.mxu0
    %v197 = vadd.f32 %v102, %v196
    %v198 = vpop.f32.mrf.mxu0
    %199 = vdwg.mxu0
    %v200 = vld [vmem:[%s7 + $0x1] sm:$0x1]
    %202 = vset.pattern.permute.xlu0 0
    %203 = vperm.xlu0 %202, %v68
    %v204 = vpop.permute.xlu0 %203
    %207 = vset.pattern.permute.xlu0 0
    %208 = vperm.xlu0 %207, %v69
    %v209 = vpop.permute.xlu0 %208
    %212 = vset.pattern.permute.xlu0 0
    %213 = vperm.xlu0 %212, %v70
    %v214 = vpop.permute.xlu0 %213
    %217 = vset.pattern.permute.xlu0 0
    %218 = vperm.xlu0 %217, %v71
    %v219 = vpop.permute.xlu0 %218
    %222 = vset.pattern.permute.xlu0 0
    %223 = vperm.xlu0 %222, %v72
    %v224 = vpop.permute.xlu0 %223
    %227 = vset.pattern.permute.xlu0 0
    %228 = vperm.xlu0 %227, %v73
    %v229 = vpop.permute.xlu0 %228
    %232 = vset.pattern.permute.xlu0 0
    %233 = vperm.xlu0 %232, %v74
    %v234 = vpop.permute.xlu0 %233
    %237 = vset.pattern.permute.xlu0 0
    %238 = vperm.xlu0 %237, %v75
    %v239 = vpop.permute.xlu0 %238
    %v241 = vlaneseq
    %v242 = vshrl.u32 %v241, 7
    %v243 = vsub.s32 0, %v242
    %v244 = vrot.slane %v200, %v243
    %v245 = vmul.f32 %v204, %v244
    %v246 = vmul.f32 %v209, %v244
    %v247 = vmul.f32 %v214, %v244
    %v248 = vmul.f32 %v219, %v244
    %v249 = vmul.f32 %v224, %v244
    %v250 = vmul.f32 %v229, %v244
    %v251 = vmul.f32 %v234, %v244
    %v252 = vmul.f32 %v239, %v244
    %v253 = vld [vmem:[%s7 + $0x2] sm:$0x1]
    %v254 = vlaneseq
    %v255 = vshrl.u32 %v254, 7
    %v256 = vsub.s32 0, %v255
    %v257 = vrot.slane %v253, %v256
    %v258 = vadd.f32 %v245, %v257
    %v259 = vadd.f32 %v246, %v257
    %v260 = vadd.f32 %v247, %v257
    %v261 = vadd.f32 %v248, %v257
    %v262 = vadd.f32 %v249, %v257
    %v263 = vadd.f32 %v250, %v257
    %v264 = vadd.f32 %v251, %v257
    %v265 = vadd.f32 %v252, %v257
    %v266 = vld [vmem:[#allocation2 + $0x4] sm:$0xff]
    %v267 = vld [vmem:[#allocation2 + $0xc] sm:$0xff]
    %v268 = vld [vmem:[#allocation2 + $0x34] sm:$0xff]
    %v269 = vld [vmem:[#allocation2 + $0x3c] sm:$0xff]
    %v270 = vld [vmem:[#allocation2 + $0x64] sm:$0xff]
    %v271 = vld [vmem:[#allocation2 + $0x6c] sm:$0xff]
    %v272 = vld [vmem:[#allocation2 + $0x94] sm:$0xff]
    %v273 = vld [vmem:[#allocation2 + $0x9c] sm:$0xff]
    %v274 = vld [vmem:[#allocation2 + $0xc4] sm:$0xff]
    %v275 = vld [vmem:[#allocation2 + $0xcc] sm:$0xff]
    %v276 = vld [vmem:[#allocation2 + $0xf4] sm:$0xff]
    %v277 = vld [vmem:[#allocation2 + $0xfc] sm:$0xff]
    %v278 = vld [vmem:[#allocation2 + $0x124] sm:$0xff]
    %v279 = vld [vmem:[#allocation2 + $0x12c] sm:$0xff]
    %v280 = vld [vmem:[#allocation2 + $0x154] sm:$0xff]
    %v281 = vld [vmem:[#allocation2 + $0x15c] sm:$0xff]
    %v282 = vld [vmem:[#allocation2 + $0x184] sm:$0xff]
    %v283 = vld [vmem:[#allocation2 + $0x18c] sm:$0xff]
    %v284 = vld [vmem:[#allocation2 + $0x1b4] sm:$0xff]
    %v285 = vld [vmem:[#allocation2 + $0x1bc] sm:$0xff]
    %v286 = vld [vmem:[#allocation2 + $0x1e4] sm:$0xff]
    %v287 = vld [vmem:[#allocation2 + $0x1ec] sm:$0xff]
    %v288 = vld [vmem:[#allocation2 + $0x214] sm:$0xff]
    %v289 = vld [vmem:[#allocation2 + $0x21c] sm:$0xff]
    %v290 = vld [vmem:[#allocation2 + $0x244] sm:$0xff]
    %v291 = vld [vmem:[#allocation2 + $0x24c] sm:$0xff]
    %v292 = vld [vmem:[#allocation2 + $0x274] sm:$0xff]
    %v293 = vld [vmem:[#allocation2 + $0x27c] sm:$0xff]
    %v294 = vld [vmem:[#allocation2 + $0x2a4] sm:$0xff]
    %v295 = vld [vmem:[#allocation2 + $0x2ac] sm:$0xff]
    %v296 = vld [vmem:[#allocation2 + $0x2d4] sm:$0xff]
    %v297 = vld [vmem:[#allocation2 + $0x2dc] sm:$0xff]
    %v298 = vpack.c.bf16 %v189, %v186
    %v299 = vpack.c.bf16 %v197, %v194
    %v300 = vld [vmem:[%s6] ss:$2 sm:$0xf]
    %v302 = vlaneseq
    %v303 = vshrl.u32 %v302, 7
    %v304 = vsub.s32 0, %v303
    %v305 = vrot.slane %v300, %v304
    %v306 = vlaneseq
    %v307 = vshrl.u32 %v306, 7
    %v308 = vsub.s32 1, %v307
    %v309 = vrot.slane %v300, %v308
    %v310 = vlaneseq
    %v311 = vshrl.u32 %v310, 7
    %v312 = vsub.s32 2, %v311
    %v313 = vrot.slane %v300, %v312
    %v314 = vlaneseq
    %v315 = vshrl.u32 %v314, 7
    %v316 = vsub.s32 3, %v315
    %v317 = vrot.slane %v300, %v316
    %v354 = vunpack.c.l.b16 %v266
    %v355 = vunpack.c.h.b16 %v266
    %v356 = vunpack.c.l.b16 %v267
    %v357 = vunpack.c.h.b16 %v267
    %v358 = vunpack.c.l.b16 %v268
    %v359 = vunpack.c.h.b16 %v268
    %v360 = vunpack.c.l.b16 %v269
    %v361 = vunpack.c.h.b16 %v269
    %v362 = vunpack.c.l.b16 %v270
    %v363 = vunpack.c.h.b16 %v270
    %v364 = vunpack.c.l.b16 %v271
    %v365 = vunpack.c.h.b16 %v271
    %v366 = vunpack.c.l.b16 %v272
    %v367 = vunpack.c.h.b16 %v272
    %v368 = vunpack.c.l.b16 %v273
    %v369 = vunpack.c.h.b16 %v273
    %v370 = vunpack.c.l.b16 %v274
    %v371 = vunpack.c.h.b16 %v274
    %v372 = vunpack.c.l.b16 %v275
    %v373 = vunpack.c.h.b16 %v275
    %v374 = vunpack.c.l.b16 %v276
    %v375 = vunpack.c.h.b16 %v276
    %v376 = vunpack.c.l.b16 %v277
    %v377 = vunpack.c.h.b16 %v277
    %v378 = vunpack.c.l.b16 %v278
    %v379 = vunpack.c.h.b16 %v278
    %v380 = vunpack.c.l.b16 %v279
    %v381 = vunpack.c.h.b16 %v279
    %v382 = vunpack.c.l.b16 %v280
    %v383 = vunpack.c.h.b16 %v280
    %v384 = vunpack.c.l.b16 %v281
    %v385 = vunpack.c.h.b16 %v281
    %v386 = vunpack.c.l.b16 %v282
    %v387 = vunpack.c.h.b16 %v282
    %v388 = vunpack.c.l.b16 %v283
    %v389 = vunpack.c.h.b16 %v283
    %v390 = vunpack.c.l.b16 %v284
    %v391 = vunpack.c.h.b16 %v284
    %v392 = vunpack.c.l.b16 %v285
    %v393 = vunpack.c.h.b16 %v285
    %v394 = vunpack.c.l.b16 %v286
    %v395 = vunpack.c.h.b16 %v286
    %v396 = vunpack.c.l.b16 %v287
    %v397 = vunpack.c.h.b16 %v287
    %v398 = vunpack.c.l.b16 %v288
    %v399 = vunpack.c.h.b16 %v288
    %v400 = vunpack.c.l.b16 %v289
    %v401 = vunpack.c.h.b16 %v289
    %v402 = vunpack.c.l.b16 %v290
    %v403 = vunpack.c.h.b16 %v290
    %v404 = vunpack.c.l.b16 %v291
    %v405 = vunpack.c.h.b16 %v291
    %v406 = vunpack.c.l.b16 %v292
    %v407 = vunpack.c.h.b16 %v292
    %v408 = vunpack.c.l.b16 %v293
    %v409 = vunpack.c.h.b16 %v293
    %v410 = vunpack.c.l.b16 %v294
    %v411 = vunpack.c.h.b16 %v294
    %v412 = vunpack.c.l.b16 %v295
    %v413 = vunpack.c.h.b16 %v295
    %v414 = vunpack.c.l.b16 %v296
    %v415 = vunpack.c.h.b16 %v296
    %v416 = vunpack.c.l.b16 %v297
    %v417 = vunpack.c.h.b16 %v297
    %v418 = vpack.c.b16 %v358, %v354
    %v419 = vpack.c.b16 %v359, %v355
    %v420 = vpack.c.b16 %v360, %v356
    %v421 = vpack.c.b16 %v361, %v357
    %v422 = vpack.c.b16 %v366, %v362
    %v423 = vpack.c.b16 %v367, %v363
    %v424 = vpack.c.b16 %v368, %v364
    %v425 = vpack.c.b16 %v369, %v365
    %v426 = vpack.c.b16 %v374, %v370
    %v427 = vpack.c.b16 %v375, %v371
    %v428 = vpack.c.b16 %v376, %v372
    %v429 = vpack.c.b16 %v377, %v373
    %v430 = vpack.c.b16 %v382, %v378
    %v431 = vpack.c.b16 %v383, %v379
    %v432 = vpack.c.b16 %v384, %v380
    %v433 = vpack.c.b16 %v385, %v381
    %v434 = vpack.c.b16 %v390, %v386
    %v435 = vpack.c.b16 %v391, %v387
    %v436 = vpack.c.b16 %v392, %v388
    %v437 = vpack.c.b16 %v393, %v389
    %v438 = vpack.c.b16 %v398, %v394
    %v439 = vpack.c.b16 %v399, %v395
    %v440 = vpack.c.b16 %v400, %v396
    %v441 = vpack.c.b16 %v401, %v397
    %v442 = vpack.c.b16 %v406, %v402
    %v443 = vpack.c.b16 %v407, %v403
    %v444 = vpack.c.b16 %v408, %v404
    %v445 = vpack.c.b16 %v409, %v405
    %v446 = vpack.c.b16 %v414, %v410
    %v447 = vpack.c.b16 %v415, %v411
    %v448 = vpack.c.b16 %v416, %v412
    %v449 = vpack.c.b16 %v417, %v413
    %482 = vmatprep.subr.bf16.mxu0 %v447
    %483 = vmatpush1.bf16.msra.mxu0 %v446
    %484 = vmatprep.subr.bf16.mxu0 %v443
    %485 = vmatpush1.bf16.msra.mxu0 %v442
    %486 = vmatprep.subr.bf16.mxu0 %v439
    %487 = vmatpush1.bf16.msra.mxu0 %v438
    %488 = vmatprep.subr.bf16.mxu0 %v435
    %489 = vmatpush1.bf16.msra.mxu0 %v434
    %490 = vmatprep.subr.bf16.mxu0 %v431
    %491 = vmatpush1.bf16.msra.mxu0 %v430
    %492 = vmatprep.subr.bf16.mxu0 %v427
    %493 = vmatpush1.bf16.msra.mxu0 %v426
    %494 = vmatprep.subr.bf16.mxu0 %v423
    %495 = vmatpush1.bf16.msra.mxu0 %v422
    %496 = vmatprep.subr.bf16.mxu0 %v419
    %497 = vmatpush1.bf16.msra.mxu0 %v418
    %498 = vmatprep.subr.bf16.mxu0 0
    %499 = vmatpush2.bf16.msra.mxu0 0
    %500 = vmatprep.subr.bf16.mxu0 0
    %501 = vmatpush2.bf16.msra.mxu0 0
    %502 = vmatprep.subr.bf16.mxu0 0
    %503 = vmatpush2.bf16.msra.mxu0 0
    %504 = vmatprep.subr.bf16.mxu0 0
    %505 = vmatpush2.bf16.msra.mxu0 0
    %506 = vmatprep.subr.bf16.mxu0 0
    %507 = vmatpush2.bf16.msra.mxu0 0
    %508 = vmatprep.subr.bf16.mxu0 0
    %509 = vmatpush2.bf16.msra.mxu0 0
    %510 = vmatprep.subr.bf16.mxu0 0
    %511 = vmatpush2.bf16.msra.mxu0 0
    %512 = vmatprep.subr.bf16.mxu0 0
    %513 = vmatpush2.bf16.msra.mxu0 0
    %514 = vmatprep.mubr.bf16.mxu0 0
    %515 = vmatmul.mubr.bf16.gmra.mxu0 %v298
    %v516 = vpop.f32.mrf.mxu0
    %v517 = vadd.f32 %v305, %v516
    %v518 = vpop.f32.mrf.mxu0
    %v519 = vadd.f32 %v309, %v518
    %v520 = vpop.f32.mrf.mxu0
    %v521 = vadd.f32 %v305, %v520
    %v522 = vpop.f32.mrf.mxu0
    %v523 = vadd.f32 %v309, %v522
    %524 = vmatprep.mubr.bf16.mxu0 0
    %525 = vmatmul.mubr.bf16.gmra.mxu0 %v299
    %v526 = vpop.f32.mrf.mxu0
    %v527 = vadd.f32 %v305, %v526
    %v528 = vpop.f32.mrf.mxu0
    %v529 = vadd.f32 %v309, %v528
    %v530 = vpop.f32.mrf.mxu0
    %v531 = vadd.f32 %v305, %v530
    %v532 = vpop.f32.mrf.mxu0
    %v533 = vadd.f32 %v309, %v532
    %534 = vdwg.mxu0
    %535 = vmatprep.subr.bf16.mxu0 %v449
    %536 = vmatpush1.bf16.msra.mxu0 %v448
    %537 = vmatprep.subr.bf16.mxu0 %v445
    %538 = vmatpush1.bf16.msra.mxu0 %v444
    %539 = vmatprep.subr.bf16.mxu0 %v441
    %540 = vmatpush1.bf16.msra.mxu0 %v440
    %541 = vmatprep.subr.bf16.mxu0 %v437
    %542 = vmatpush1.bf16.msra.mxu0 %v436
    %543 = vmatprep.subr.bf16.mxu0 %v433
    %544 = vmatpush1.bf16.msra.mxu0 %v432
    %545 = vmatprep.subr.bf16.mxu0 %v429
    %546 = vmatpush1.bf16.msra.mxu0 %v428
    %547 = vmatprep.subr.bf16.mxu0 %v425
    %548 = vmatpush1.bf16.msra.mxu0 %v424
    %549 = vmatprep.subr.bf16.mxu0 %v421
    %550 = vmatpush1.bf16.msra.mxu0 %v420
    %551 = vmatprep.subr.bf16.mxu0 0
    %552 = vmatpush2.bf16.msra.mxu0 0
    %553 = vmatprep.subr.bf16.mxu0 0
    %554 = vmatpush2.bf16.msra.mxu0 0
    %555 = vmatprep.subr.bf16.mxu0 0
    %556 = vmatpush2.bf16.msra.mxu0 0
    %557 = vmatprep.subr.bf16.mxu0 0
    %558 = vmatpush2.bf16.msra.mxu0 0
    %559 = vmatprep.subr.bf16.mxu0 0
    %560 = vmatpush2.bf16.msra.mxu0 0
    %561 = vmatprep.subr.bf16.mxu0 0
    %562 = vmatpush2.bf16.msra.mxu0 0
    %563 = vmatprep.subr.bf16.mxu0 0
    %564 = vmatpush2.bf16.msra.mxu0 0
    %565 = vmatprep.subr.bf16.mxu0 0
    %566 = vmatpush2.bf16.msra.mxu0 0
    %567 = vmatprep.mubr.bf16.mxu0 0
    %568 = vmatmul.mubr.bf16.gmra.mxu0 %v298
    %v569 = vpop.f32.mrf.mxu0
    %v570 = vadd.f32 %v313, %v569
    %v571 = vpop.f32.mrf.mxu0
    %v572 = vadd.f32 %v317, %v571
    %v573 = vpop.f32.mrf.mxu0
    %v574 = vadd.f32 %v313, %v573
    %v575 = vpop.f32.mrf.mxu0
    %v576 = vadd.f32 %v317, %v575
    %577 = vmatprep.mubr.bf16.mxu0 0
    %578 = vmatmul.mubr.bf16.gmra.mxu0 %v299
    %v579 = vpop.f32.mrf.mxu0
    %v580 = vadd.f32 %v313, %v579
    %v581 = vpop.f32.mrf.mxu0
    %v582 = vadd.f32 %v317, %v581
    %v583 = vpop.f32.mrf.mxu0
    %v584 = vadd.f32 %v313, %v583
    %v585 = vpop.f32.mrf.mxu0
    %v586 = vadd.f32 %v317, %v585
    %587 = vdwg.mxu0
    %v588 = vld [vmem:[#allocation2 + $0x14] sm:$0xf]
    %v589 = vld [vmem:[#allocation2 + $0x44] sm:$0xf]
    %v590 = vld [vmem:[#allocation2 + $0x74] sm:$0xf]
    %v591 = vld [vmem:[#allocation2 + $0xa4] sm:$0xf]
    %v592 = vld [vmem:[#allocation2 + $0xd4] sm:$0xf]
    %v593 = vld [vmem:[#allocation2 + $0x104] sm:$0xf]
    %v594 = vld [vmem:[#allocation2 + $0x134] sm:$0xf]
    %v595 = vld [vmem:[#allocation2 + $0x164] sm:$0xf]
    %v596 = vld [vmem:[#allocation2 + $0x194] sm:$0xf]
    %v597 = vld [vmem:[#allocation2 + $0x1c4] sm:$0xf]
    %v598 = vld [vmem:[#allocation2 + $0x1f4] sm:$0xf]
    %v599 = vld [vmem:[#allocation2 + $0x224] sm:$0xf]
    %v600 = vld [vmem:[#allocation2 + $0x254] sm:$0xf]
    %v601 = vld [vmem:[#allocation2 + $0x284] sm:$0xf]
    %v602 = vld [vmem:[#allocation2 + $0x2b4] sm:$0xf]
    %v603 = vld [vmem:[#allocation2 + $0x2e4] sm:$0xf]
    %v604 = vpack.c.bf16 %v259, %v258
    %v605 = vpack.c.bf16 %v261, %v260
    %v606 = vpack.c.bf16 %v263, %v262
    %v607 = vpack.c.bf16 %v265, %v264
    %v608 = vld [vmem:[%s7 + $0x3] sm:$0x1]
    %v609 = vlaneseq
    %v610 = vshrl.u32 %v609, 7
    %v611 = vsub.s32 0, %v610
    %v612 = vrot.slane %v608, %v611
    %v629 = vunpack.c.l.b16 %v588
    %v630 = vunpack.c.l.b16 %v589
    %v631 = vunpack.c.l.b16 %v590
    %v632 = vunpack.c.l.b16 %v591
    %v633 = vunpack.c.l.b16 %v592
    %v634 = vunpack.c.l.b16 %v593
    %v635 = vunpack.c.l.b16 %v594
    %v636 = vunpack.c.l.b16 %v595
    %v637 = vunpack.c.l.b16 %v596
    %v638 = vunpack.c.l.b16 %v597
    %v639 = vunpack.c.l.b16 %v598
    %v640 = vunpack.c.l.b16 %v599
    %v641 = vunpack.c.l.b16 %v600
    %v642 = vunpack.c.l.b16 %v601
    %v643 = vunpack.c.l.b16 %v602
    %v644 = vunpack.c.l.b16 %v603
    %v645 = vpack.c.b16 %v630, %v629
    %v646 = vpack.c.b16 %v632, %v631
    %v647 = vpack.c.b16 %v634, %v633
    %v648 = vpack.c.b16 %v636, %v635
    %v649 = vpack.c.b16 %v638, %v637
    %v650 = vpack.c.b16 %v640, %v639
    %v651 = vpack.c.b16 %v642, %v641
    %v652 = vpack.c.b16 %v644, %v643
    %661 = vmatprep.subr.bf16.mxu0 0
    %662 = vmatpush1.bf16.msra.mxu0 %v652
    %663 = vmatprep.subr.bf16.mxu0 0
    %664 = vmatpush1.bf16.msra.mxu0 %v651
    %665 = vmatprep.subr.bf16.mxu0 0
    %666 = vmatpush1.bf16.msra.mxu0 %v650
    %667 = vmatprep.subr.bf16.mxu0 0
    %668 = vmatpush1.bf16.msra.mxu0 %v649
    %669 = vmatprep.subr.bf16.mxu0 0
    %670 = vmatpush1.bf16.msra.mxu0 %v648
    %671 = vmatprep.subr.bf16.mxu0 0
    %672 = vmatpush1.bf16.msra.mxu0 %v647
    %673 = vmatprep.subr.bf16.mxu0 0
    %674 = vmatpush1.bf16.msra.mxu0 %v646
    %675 = vmatprep.subr.bf16.mxu0 0
    %676 = vmatpush1.bf16.msra.mxu0 %v645
    %677 = vmatprep.subr.bf16.mxu0 0
    %678 = vmatpush2.bf16.msra.mxu0 0
    %679 = vmatprep.subr.bf16.mxu0 0
    %680 = vmatpush2.bf16.msra.mxu0 0
    %681 = vmatprep.subr.bf16.mxu0 0
    %682 = vmatpush2.bf16.msra.mxu0 0
    %683 = vmatprep.subr.bf16.mxu0 0
    %684 = vmatpush2.bf16.msra.mxu0 0
    %685 = vmatprep.subr.bf16.mxu0 0
    %686 = vmatpush2.bf16.msra.mxu0 0
    %687 = vmatprep.subr.bf16.mxu0 0
    %688 = vmatpush2.bf16.msra.mxu0 0
    %689 = vmatprep.subr.bf16.mxu0 0
    %690 = vmatpush2.bf16.msra.mxu0 0
    %691 = vmatprep.subr.bf16.mxu0 0
    %692 = vmatpush2.bf16.msra.mxu0 0
    %693 = vmatprep.mubr.bf16.mxu0 0
    %694 = vmatmul.mubr.bf16.gmra.mxu0 %v604
    %v695 = vpop.f32.mrf.mxu0
    %v696 = vadd.f32 %v612, %v695
    %v697 = vpop.f32.mrf.mxu0
    %v698 = vpop.f32.mrf.mxu0
    %v699 = vadd.f32 %v612, %v698
    %v700 = vpop.f32.mrf.mxu0
    %701 = vmatprep.mubr.bf16.mxu0 0
    %702 = vmatmul.mubr.bf16.gmra.mxu0 %v605
    %v703 = vpop.f32.mrf.mxu0
    %v704 = vadd.f32 %v612, %v703
    %v705 = vpop.f32.mrf.mxu0
    %v706 = vpop.f32.mrf.mxu0
    %v707 = vadd.f32 %v612, %v706
    %v708 = vpop.f32.mrf.mxu0
    %709 = vmatprep.mubr.bf16.mxu0 0
    %710 = vmatmul.mubr.bf16.gmra.mxu0 %v606
    %v711 = vpop.f32.mrf.mxu0
    %v712 = vadd.f32 %v612, %v711
    %v713 = vpop.f32.mrf.mxu0
    %v714 = vpop.f32.mrf.mxu0
    %v715 = vadd.f32 %v612, %v714
    %v716 = vpop.f32.mrf.mxu0
    %717 = vmatprep.mubr.bf16.mxu0 0
    %718 = vmatmul.mubr.bf16.gmra.mxu0 %v607
    %v719 = vpop.f32.mrf.mxu0
    %v720 = vadd.f32 %v612, %v719
    %v721 = vpop.f32.mrf.mxu0
    %v722 = vpop.f32.mrf.mxu0
    %v723 = vadd.f32 %v612, %v722
    %v724 = vpop.f32.mrf.mxu0
    %725 = vdwg.mxu0
    %v726 = vpack.c.bf16 %v523, %v519
    %v727 = vpack.c.bf16 %v574, %v570
    %v728 = vpack.c.bf16 %v533, %v529
    %v729 = vpack.c.bf16 %v584, %v580
    %v738 = vunpack.c.l.b16 %v44
    %v739 = vunpack.c.l.b16 %v45
    %v740 = vunpack.c.l.b16 %v46
    %v741 = vunpack.c.l.b16 %v47
    %v742 = vunpack.c.l.b16 %v48
    %v743 = vunpack.c.l.b16 %v49
    %v744 = vunpack.c.l.b16 %v50
    %v745 = vunpack.c.l.b16 %v51
    %v746 = vpack.c.b16 %v739, %v738
    %v747 = vpack.c.b16 %v741, %v740
    %v748 = vpack.c.b16 %v743, %v742
    %v749 = vpack.c.b16 %v745, %v744
    %vm750 = vcmask 261120
    %v752 = vsel %vm750, %v746, 0
    %v755 = vsel %vm750, %v747, 0
    %v758 = vsel %vm750, %v748, 0
    %v761 = vsel %vm750, %v749, 0
    %763 = vmatprep.subr.bf16.mxu0 0
    %764 = vmatpush1.bf16.msra.mxu0 0
    %765 = vmatprep.subr.bf16.mxu0 0
    %766 = vmatpush1.bf16.msra.mxu0 0
    %767 = vmatprep.subr.bf16.mxu0 0
    %768 = vmatpush1.bf16.msra.mxu0 0
    %769 = vmatprep.subr.bf16.mxu0 0
    %770 = vmatpush1.bf16.msra.mxu0 0
    %771 = vmatprep.subr.bf16.mxu0 0
    %772 = vmatpush1.bf16.msra.mxu0 0
    %773 = vmatprep.subr.bf16.mxu0 0
    %774 = vmatpush1.bf16.msra.mxu0 0
    %775 = vmatprep.subr.bf16.mxu0 %v729
    %776 = vmatpush1.bf16.msra.mxu0 %v728
    %777 = vmatprep.subr.bf16.mxu0 %v727
    %778 = vmatpush1.bf16.msra.mxu0 %v726
    %779 = vmatprep.subr.bf16.mxu0 0
    %780 = vmatpush2.bf16.msra.mxu0 0
    %781 = vmatprep.subr.bf16.mxu0 0
    %782 = vmatpush2.bf16.msra.mxu0 0
    %783 = vmatprep.subr.bf16.mxu0 0
    %784 = vmatpush2.bf16.msra.mxu0 0
    %785 = vmatprep.subr.bf16.mxu0 0
    %786 = vmatpush2.bf16.msra.mxu0 0
    %787 = vmatprep.subr.bf16.mxu0 0
    %788 = vmatpush2.bf16.msra.mxu0 0
    %789 = vmatprep.subr.bf16.mxu0 0
    %790 = vmatpush2.bf16.msra.mxu0 0
    %791 = vmatprep.subr.bf16.mxu0 0
    %792 = vmatpush2.bf16.msra.mxu0 0
    %793 = vmatprep.subr.bf16.mxu0 0
    %794 = vmatpush2.bf16.msra.mxu0 0
    %795 = vmatprep.mubr.bf16.mxu0 0
    %796 = vmatmul.mubr.bf16.gmra.mxu0 %v752
    %v797 = vpop.f32.mrf.mxu0
    %v798 = vadd.f32 0.0, %v797
    %v799 = vpop.f32.mrf.mxu0
    %v800 = vadd.f32 0.0, %v799
    %v801 = vpop.f32.mrf.mxu0
    %v802 = vadd.f32 0.0, %v801
    %v803 = vpop.f32.mrf.mxu0
    %v804 = vadd.f32 0.0, %v803
    %805 = vmatprep.mubr.bf16.mxu0 0
    %806 = vmatmul.mubr.bf16.gmra.mxu0 %v755
    %v807 = vpop.f32.mrf.mxu0
    %v808 = vadd.f32 0.0, %v807
    %v809 = vpop.f32.mrf.mxu0
    %v810 = vadd.f32 0.0, %v809
    %v811 = vpop.f32.mrf.mxu0
    %v812 = vadd.f32 0.0, %v811
    %v813 = vpop.f32.mrf.mxu0
    %v814 = vadd.f32 0.0, %v813
    %815 = vmatprep.mubr.bf16.mxu0 0
    %816 = vmatmul.mubr.bf16.gmra.mxu0 %v758
    %v817 = vpop.f32.mrf.mxu0
    %v818 = vadd.f32 0.0, %v817
    %v819 = vpop.f32.mrf.mxu0
    %v820 = vadd.f32 0.0, %v819
    %v821 = vpop.f32.mrf.mxu0
    %v822 = vadd.f32 0.0, %v821
    %v823 = vpop.f32.mrf.mxu0
    %v824 = vadd.f32 0.0, %v823
    %825 = vmatprep.mubr.bf16.mxu0 0
    %826 = vmatmul.mubr.bf16.gmra.mxu0 %v761
    %v827 = vpop.f32.mrf.mxu0
    %v828 = vadd.f32 0.0, %v827
    %v829 = vpop.f32.mrf.mxu0
    %v830 = vadd.f32 0.0, %v829
    %v831 = vpop.f32.mrf.mxu0
    %v832 = vadd.f32 0.0, %v831
    %v833 = vpop.f32.mrf.mxu0
    %v834 = vadd.f32 0.0, %v833
    %835 = vdwg.mxu0
    %v836 = vpack.c.bf16 %v576, %v572
    %v837 = vpack.c.bf16 %v586, %v582
    %v846 = vunpack.c.l.b16 %v52
    %v847 = vunpack.c.l.b16 %v53
    %v848 = vunpack.c.l.b16 %v54
    %v849 = vunpack.c.l.b16 %v55
    %v850 = vunpack.c.l.b16 %v56
    %v851 = vunpack.c.l.b16 %v57
    %v852 = vunpack.c.l.b16 %v58
    %v853 = vunpack.c.l.b16 %v59
    %v854 = vpack.c.b16 %v847, %v846
    %v855 = vpack.c.b16 %v849, %v848
    %v856 = vpack.c.b16 %v851, %v850
    %v857 = vpack.c.b16 %v853, %v852
    %v859 = vsel %vm750, %v854, 0
    %v862 = vsel %vm750, %v855, 0
    %v865 = vsel %vm750, %v856, 0
    %v868 = vsel %vm750, %v857, 0
    %870 = vmatprep.subr.bf16.mxu0 0
    %871 = vmatpush1.bf16.msra.mxu0 0
    %872 = vmatprep.subr.bf16.mxu0 0
    %873 = vmatpush1.bf16.msra.mxu0 0
    %874 = vmatprep.subr.bf16.mxu0 0
    %875 = vmatpush1.bf16.msra.mxu0 0
    %876 = vmatprep.subr.bf16.mxu0 0
    %877 = vmatpush1.bf16.msra.mxu0 0
    %878 = vmatprep.subr.bf16.mxu0 0
    %879 = vmatpush1.bf16.msra.mxu0 0
    %880 = vmatprep.subr.bf16.mxu0 0
    %881 = vmatpush1.bf16.msra.mxu0 0
    %882 = vmatprep.subr.bf16.mxu0 0
    %883 = vmatpush1.bf16.msra.mxu0 %v837
    %884 = vmatprep.subr.bf16.mxu0 0
    %885 = vmatpush1.bf16.msra.mxu0 %v836
    %886 = vmatprep.subr.bf16.mxu0 0
    %887 = vmatpush2.bf16.msra.mxu0 0
    %888 = vmatprep.subr.bf16.mxu0 0
    %889 = vmatpush2.bf16.msra.mxu0 0
    %890 = vmatprep.subr.bf16.mxu0 0
    %891 = vmatpush2.bf16.msra.mxu0 0
    %892 = vmatprep.subr.bf16.mxu0 0
    %893 = vmatpush2.bf16.msra.mxu0 0
    %894 = vmatprep.subr.bf16.mxu0 0
    %895 = vmatpush2.bf16.msra.mxu0 0
    %896 = vmatprep.subr.bf16.mxu0 0
    %897 = vmatpush2.bf16.msra.mxu0 0
    %898 = vmatprep.subr.bf16.mxu0 0
    %899 = vmatpush2.bf16.msra.mxu0 0
    %900 = vmatprep.subr.bf16.mxu0 0
    %901 = vmatpush2.bf16.msra.mxu0 0
    %902 = vmatprep.mubr.bf16.mxu0 0
    %903 = vmatmul.mubr.bf16.gmra.mxu0 %v859
    %v904 = vpop.f32.mrf.mxu0
    %v905 = vadd.f32 0.0, %v904
    %v906 = vpop.f32.mrf.mxu0
    %v907 = vpop.f32.mrf.mxu0
    %v908 = vadd.f32 0.0, %v907
    %v909 = vpop.f32.mrf.mxu0
    %910 = vmatprep.mubr.bf16.mxu0 0
    %911 = vmatmul.mubr.bf16.gmra.mxu0 %v862
    %v912 = vpop.f32.mrf.mxu0
    %v913 = vadd.f32 0.0, %v912
    %v914 = vpop.f32.mrf.mxu0
    %v915 = vpop.f32.mrf.mxu0
    %v916 = vadd.f32 0.0, %v915
    %v917 = vpop.f32.mrf.mxu0
    %918 = vmatprep.mubr.bf16.mxu0 0
    %919 = vmatmul.mubr.bf16.gmra.mxu0 %v865
    %v920 = vpop.f32.mrf.mxu0
    %v921 = vadd.f32 0.0, %v920
    %v922 = vpop.f32.mrf.mxu0
    %v923 = vpop.f32.mrf.mxu0
    %v924 = vadd.f32 0.0, %v923
    %v925 = vpop.f32.mrf.mxu0
    %926 = vmatprep.mubr.bf16.mxu0 0
    %927 = vmatmul.mubr.bf16.gmra.mxu0 %v868
    %v928 = vpop.f32.mrf.mxu0
    %v929 = vadd.f32 0.0, %v928
    %v930 = vpop.f32.mrf.mxu0
    %v931 = vpop.f32.mrf.mxu0
    %v932 = vadd.f32 0.0, %v931
    %v933 = vpop.f32.mrf.mxu0
    %934 = vdwg.mxu0
    %v935 = vadd.f32 %v696, %v798
    %v936 = vadd.f32 %v699, %v802
    %v937 = vadd.f32 %v704, %v808
    %v938 = vadd.f32 %v707, %v812
    %v939 = vadd.f32 %v712, %v818
    %v940 = vadd.f32 %v715, %v822
    %v941 = vadd.f32 %v720, %v828
    %v942 = vadd.f32 %v723, %v832
    %v943 = vadd.f32 %v935, %v905
    %v944 = vadd.f32 %v936, %v908
    %v945 = vadd.f32 %v937, %v913
    %v946 = vadd.f32 %v938, %v916
    %v947 = vadd.f32 %v939, %v921
    %v948 = vadd.f32 %v940, %v924
    %v949 = vadd.f32 %v941, %v929
    %v950 = vadd.f32 %v942, %v932
    %v951 = vxor.u32 %v943, 2147483648
    %v952 = vxor.u32 %v944, 2147483648
    %v953 = vxor.u32 %v945, 2147483648
    %v954 = vxor.u32 %v946, 2147483648
    %v955 = vxor.u32 %v947, 2147483648
    %v956 = vxor.u32 %v948, 2147483648
    %v957 = vxor.u32 %v949, 2147483648
    %v958 = vxor.u32 %v950, 2147483648
    %v959 = vmul.f32 %v951, 1.442695
    %v960 = vpow.pop %v959
    %v961 = vmul.f32 %v952, 1.442695
    %v962 = vpow.pop %v961
    %v963 = vmul.f32 %v953, 1.442695
    %v964 = vpow.pop %v963
    %v965 = vmul.f32 %v954, 1.442695
    %v966 = vpow.pop %v965
    %v967 = vmul.f32 %v955, 1.442695
    %v968 = vpow.pop %v967
    %v969 = vmul.f32 %v956, 1.442695
    %v970 = vpow.pop %v969
    %v971 = vmul.f32 %v957, 1.442695
    %v972 = vpow.pop %v971
    %v973 = vmul.f32 %v958, 1.442695
    %v974 = vpow.pop %v973
    %v975 = vadd.f32 %v960, 1.0
    %v976 = vadd.f32 %v962, 1.0
    %v977 = vadd.f32 %v964, 1.0
    %v978 = vadd.f32 %v966, 1.0
    %v979 = vadd.f32 %v968, 1.0
    %v980 = vadd.f32 %v970, 1.0
    %v981 = vadd.f32 %v972, 1.0
    %v982 = vadd.f32 %v974, 1.0
    %v983 = vrcp.pop %v975
    %v984 = vmul.f32 1.0, %v983
    %v985 = vrcp.pop %v976
    %v986 = vmul.f32 1.0, %v985
    %v987 = vrcp.pop %v977
    %v988 = vmul.f32 1.0, %v987
    %v989 = vrcp.pop %v978
    %v990 = vmul.f32 1.0, %v989
    %v991 = vrcp.pop %v979
    %v992 = vmul.f32 1.0, %v991
    %v993 = vrcp.pop %v980
    %v994 = vmul.f32 1.0, %v993
    %v995 = vrcp.pop %v981
    %v996 = vmul.f32 1.0, %v995
    %v997 = vrcp.pop %v982
    %v998 = vmul.f32 1.0, %v997
    %v999 = vmax.f32 %v984, 0.0001
    %v1000 = vmax.f32 %v986, 0.0001
    %v1001 = vmax.f32 %v988, 0.0001
    %v1002 = vmax.f32 %v990, 0.0001
    %v1003 = vmax.f32 %v992, 0.0001
    %v1004 = vmax.f32 %v994, 0.0001
    %v1005 = vmax.f32 %v996, 0.0001
    %v1006 = vmax.f32 %v998, 0.0001
    %v1007 = vmin.f32 %v999, 0.9999
    %v1008 = vmin.f32 %v1000, 0.9999
    %v1009 = vmin.f32 %v1001, 0.9999
    %v1010 = vmin.f32 %v1002, 0.9999
    %v1011 = vmin.f32 %v1003, 0.9999
    %v1012 = vmin.f32 %v1004, 0.9999
    %v1013 = vmin.f32 %v1005, 0.9999
    %v1014 = vmin.f32 %v1006, 0.9999
    %v1015 = vmul.f32 %v1007, %v800
    %v1016 = vmul.f32 %v1008, %v804
    %v1017 = vmul.f32 %v1009, %v810
    %v1018 = vmul.f32 %v1010, %v814
    %v1019 = vmul.f32 %v1011, %v820
    %v1020 = vmul.f32 %v1012, %v824
    %v1021 = vmul.f32 %v1013, %v830
    %v1022 = vmul.f32 %v1014, %v834
    %v1023 = vpack.c.bf16 %v1016, %v1015
    %v1024 = vpack.c.bf16 %v1008, %v1007
    %v1025 = vpack.c.bf16 %v1018, %v1017
    %v1026 = vpack.c.bf16 %v1010, %v1009
    %v1027 = vpack.c.bf16 %v1020, %v1019
    %v1028 = vpack.c.bf16 %v1012, %v1011
    %v1029 = vpack.c.bf16 %v1022, %v1021
    %v1030 = vpack.c.bf16 %v1014, %v1013
    %v1035 = vunpack.c.l.b16 %v60
    %v1036 = vunpack.c.l.b16 %v61
    %v1037 = vunpack.c.l.b16 %v62
    %v1038 = vunpack.c.l.b16 %v63
    %v1039 = vpack.c.b16 %v1036, %v1035
    %v1040 = vpack.c.b16 %v1038, %v1037
    %vm1041 = vcmask 523264
    %v1043 = vsel %vm1041, %v1039, 0
    %v1046 = vsel %vm1041, %v1040, 0
    %1048 = vmatprep.subr.bf16.mxu0 0
    %1049 = vmatpush1.bf16.msra.mxu0 0
    %1050 = vmatprep.subr.bf16.mxu0 0
    %1051 = vmatpush1.bf16.msra.mxu0 0
    %1052 = vmatprep.subr.bf16.mxu0 0
    %1053 = vmatpush1.bf16.msra.mxu0 0
    %1054 = vmatprep.subr.bf16.mxu0 0
    %1055 = vmatpush1.bf16.msra.mxu0 0
    %1056 = vmatprep.subr.bf16.mxu0 %v1030
    %1057 = vmatpush1.bf16.msra.mxu0 %v1029
    %1058 = vmatprep.subr.bf16.mxu0 %v1028
    %1059 = vmatpush1.bf16.msra.mxu0 %v1027
    %1060 = vmatprep.subr.bf16.mxu0 %v1026
    %1061 = vmatpush1.bf16.msra.mxu0 %v1025
    %1062 = vmatprep.subr.bf16.mxu0 %v1024
    %1063 = vmatpush1.bf16.msra.mxu0 %v1023
    %1064 = vmatprep.subr.bf16.mxu0 0
    %1065 = vmatpush2.bf16.msra.mxu0 0
    %1066 = vmatprep.subr.bf16.mxu0 0
    %1067 = vmatpush2.bf16.msra.mxu0 0
    %1068 = vmatprep.subr.bf16.mxu0 0
    %1069 = vmatpush2.bf16.msra.mxu0 0
    %1070 = vmatprep.subr.bf16.mxu0 0
    %1071 = vmatpush2.bf16.msra.mxu0 0
    %1072 = vmatprep.subr.bf16.mxu0 0
    %1073 = vmatpush2.bf16.msra.mxu0 0
    %1074 = vmatprep.subr.bf16.mxu0 0
    %1075 = vmatpush2.bf16.msra.mxu0 0
    %1076 = vmatprep.subr.bf16.mxu0 0
    %1077 = vmatpush2.bf16.msra.mxu0 0
    %1078 = vmatprep.subr.bf16.mxu0 0
    %1079 = vmatpush2.bf16.msra.mxu0 0
    %1080 = vmatprep.mubr.bf16.mxu0 0
    %1081 = vmatmul.mubr.bf16.gmra.mxu0 %v1043
    %v1082 = vpop.f32.mrf.mxu0
    %v1083 = vadd.f32 0.0, %v1082
    %v1084 = vpop.f32.mrf.mxu0
    %v1085 = vadd.f32 0.0, %v1084
    %v1086 = vpop.f32.mrf.mxu0
    %v1087 = vadd.f32 0.0, %v1086
    %v1088 = vpop.f32.mrf.mxu0
    %v1089 = vadd.f32 0.0, %v1088
    %1090 = vmatprep.mubr.bf16.mxu0 0
    %1091 = vmatmul.mubr.bf16.gmra.mxu0 %v1046
    %v1092 = vpop.f32.mrf.mxu0
    %v1093 = vadd.f32 0.0, %v1092
    %v1094 = vpop.f32.mrf.mxu0
    %v1095 = vadd.f32 0.0, %v1094
    %v1096 = vpop.f32.mrf.mxu0
    %v1097 = vadd.f32 0.0, %v1096
    %v1098 = vpop.f32.mrf.mxu0
    %v1099 = vadd.f32 0.0, %v1098
    %1100 = vdwg.mxu0
    %v1101 = vmax.f32 %v1085, 1e-06
    %v1102 = vmax.f32 %v1089, 1e-06
    %v1103 = vmax.f32 %v1095, 1e-06
    %v1104 = vmax.f32 %v1099, 1e-06
    %v1105 = vrcp.pop %v1101
    %v1106 = vrcp.pop %v1102
    %v1107 = vrcp.pop %v1103
    %v1108 = vrcp.pop %v1104
    %v1109 = vmul.f32 %v1083, %v1105
    %v1110 = vmul.f32 %v1087, %v1106
    %v1111 = vmul.f32 %v1093, %v1107
    %v1112 = vmul.f32 %v1097, %v1108
    %v1113 = vadd.f32 %v517, %v1109
    %v1114 = vadd.f32 %v521, %v1110
    %v1115 = vadd.f32 %v527, %v1111
    %v1116 = vadd.f32 %v531, %v1112
    %1118 = vset.pattern.permute.xlu0 0
    %1119 = vperm.xlu0 %1118, %v64
    %v1120 = vpop.permute.xlu0 %1119
    %1123 = vset.pattern.permute.xlu0 0
    %1124 = vperm.xlu0 %1123, %v65
    %v1125 = vpop.permute.xlu0 %1124
    %1128 = vset.pattern.permute.xlu0 0
    %1129 = vperm.xlu0 %1128, %v66
    %v1130 = vpop.permute.xlu0 %1129
    %1133 = vset.pattern.permute.xlu0 0
    %1134 = vperm.xlu0 %1133, %v67
    %v1135 = vpop.permute.xlu0 %1134
    %v1137 = vmul.f32 %v1113, %v1120
    %v1138 = vmul.f32 %v1114, %v1125
    %v1139 = vmul.f32 %v1115, %v1130
    %v1140 = vmul.f32 %v1116, %v1135
    %v1141 = vld [vmem:[%s7 + $0x4] sm:$0x1]
    %v1142 = vld [vmem:[%s7 + $0x5] sm:$0x1]
    %v1143 = vadd.f32 %v1137, %v1138
    %v1144 = vadd.f32 %v1143, %v1139
    %v1145 = vadd.f32 %v1144, %v1140
    %v1146 = vrot.slane %v1145, 4
    %v1147 = vadd.f32 %v1145, %v1146
    %v1148 = vrot.slane %v1147, 2
    %v1149 = vadd.f32 %v1147, %v1148
    %v1150 = vrot.slane %v1149, 1
    %v1151 = vadd.f32 %v1149, %v1150
    %v1152 = vmul.f32 %v1151, 0.03125
    %v1153 = vmul.f32 %v1137, %v1137
    %v1154 = vmul.f32 %v1138, %v1138
    %v1155 = vmul.f32 %v1139, %v1139
    %v1156 = vmul.f32 %v1140, %v1140
    %v1157 = vadd.f32 %v1153, %v1154
    %v1158 = vadd.f32 %v1157, %v1155
    %v1159 = vadd.f32 %v1158, %v1156
    %v1160 = vrot.slane %v1159, 4
    %v1161 = vadd.f32 %v1159, %v1160
    %v1162 = vrot.slane %v1161, 2
    %v1163 = vadd.f32 %v1161, %v1162
    %v1164 = vrot.slane %v1163, 1
    %v1165 = vadd.f32 %v1163, %v1164
    %v1166 = vmul.f32 %v1165, 0.03125
    %v1167 = vmul.f32 %v1152, %v1152
    %v1168 = vsub.f32 %v1166, %v1167
    %v1169 = vmax.f32 %v1168, 0.0
    %v1170 = vsub.f32 %v1137, %v1152
    %v1171 = vsub.f32 %v1138, %v1152
    %v1172 = vsub.f32 %v1139, %v1152
    %v1173 = vsub.f32 %v1140, %v1152
    %v1174 = vadd.f32 %v1169, 1e-05
    %v1175 = vrsqrt.pop %v1174
    %v1176 = vmul.f32 %v1170, %v1175
    %v1177 = vmul.f32 %v1171, %v1175
    %v1178 = vmul.f32 %v1172, %v1175
    %v1179 = vmul.f32 %v1173, %v1175
    %v1180 = vlaneseq
    %v1181 = vshrl.u32 %v1180, 7
    %v1182 = vsub.s32 0, %v1181
    %v1183 = vrot.slane %v1141, %v1182
    %v1184 = vmul.f32 %v1176, %v1183
    %v1185 = vmul.f32 %v1177, %v1183
    %v1186 = vmul.f32 %v1178, %v1183
    %v1187 = vmul.f32 %v1179, %v1183
    %v1188 = vlaneseq
    %v1189 = vshrl.u32 %v1188, 7
    %v1190 = vsub.s32 0, %v1189
    %v1191 = vrot.slane %v1142, %v1190
    %v1192 = vadd.f32 %v1184, %v1191
    %v1193 = vadd.f32 %v1185, %v1191
    %v1194 = vadd.f32 %v1186, %v1191
    %v1195 = vadd.f32 %v1187, %v1191
    %1196 = vset.pattern.permute.xlu0 1
    %1197 = vperm.xlu0 %1196, %v68
    %v1198 = vpop.permute.xlu0 %1197
    %1200 = vset.pattern.permute.xlu0 1
    %1201 = vperm.xlu0 %1200, %v69
    %v1202 = vpop.permute.xlu0 %1201
    %1204 = vset.pattern.permute.xlu0 1
    %1205 = vperm.xlu0 %1204, %v70
    %v1206 = vpop.permute.xlu0 %1205
    %1208 = vset.pattern.permute.xlu0 1
    %1209 = vperm.xlu0 %1208, %v71
    %v1210 = vpop.permute.xlu0 %1209
    %1212 = vset.pattern.permute.xlu0 1
    %1213 = vperm.xlu0 %1212, %v72
    %v1214 = vpop.permute.xlu0 %1213
    %1216 = vset.pattern.permute.xlu0 1
    %1217 = vperm.xlu0 %1216, %v73
    %v1218 = vpop.permute.xlu0 %1217
    %1220 = vset.pattern.permute.xlu0 1
    %1221 = vperm.xlu0 %1220, %v74
    %v1222 = vpop.permute.xlu0 %1221
    %1224 = vset.pattern.permute.xlu0 1
    %1225 = vperm.xlu0 %1224, %v75
    %v1226 = vpop.permute.xlu0 %1225
    %v1228 = vmul.f32 %v943, %v1198
    %v1229 = vmul.f32 %v944, %v1202
    %v1230 = vmul.f32 %v945, %v1206
    %v1231 = vmul.f32 %v946, %v1210
    %v1232 = vmul.f32 %v947, %v1214
    %v1233 = vmul.f32 %v948, %v1218
    %v1234 = vmul.f32 %v949, %v1222
    %v1235 = vmul.f32 %v950, %v1226
    %v1236 = vld [vmem:[%s7 + $0x6] sm:$0x1]
    %v1237 = vld [vmem:[%s7 + $0x7] sm:$0x1]
    %v1238 = vadd.f32 %v1228, %v1229
    %v1239 = vadd.f32 %v1238, %v1230
    %v1240 = vadd.f32 %v1239, %v1231
    %v1241 = vadd.f32 %v1240, %v1232
    %v1242 = vadd.f32 %v1241, %v1233
    %v1243 = vadd.f32 %v1242, %v1234
    %v1244 = vadd.f32 %v1243, %v1235
    %v1245 = vrot.slane %v1244, 4
    %v1246 = vadd.f32 %v1244, %v1245
    %v1247 = vrot.slane %v1246, 2
    %v1248 = vadd.f32 %v1246, %v1247
    %v1249 = vrot.slane %v1248, 1
    %v1250 = vadd.f32 %v1248, %v1249
    %v1251 = vmul.f32 %v1250, 0.015625
    %v1252 = vmul.f32 %v1228, %v1228
    %v1253 = vmul.f32 %v1229, %v1229
    %v1254 = vmul.f32 %v1230, %v1230
    %v1255 = vmul.f32 %v1231, %v1231
    %v1256 = vmul.f32 %v1232, %v1232
    %v1257 = vmul.f32 %v1233, %v1233
    %v1258 = vmul.f32 %v1234, %v1234
    %v1259 = vmul.f32 %v1235, %v1235
    %v1260 = vadd.f32 %v1252, %v1253
    %v1261 = vadd.f32 %v1260, %v1254
    %v1262 = vadd.f32 %v1261, %v1255
    %v1263 = vadd.f32 %v1262, %v1256
    %v1264 = vadd.f32 %v1263, %v1257
    %v1265 = vadd.f32 %v1264, %v1258
    %v1266 = vadd.f32 %v1265, %v1259
    %v1267 = vrot.slane %v1266, 4
    %v1268 = vadd.f32 %v1266, %v1267
    %v1269 = vrot.slane %v1268, 2
    %v1270 = vadd.f32 %v1268, %v1269
    %v1271 = vrot.slane %v1270, 1
    %v1272 = vadd.f32 %v1270, %v1271
    %v1273 = vmul.f32 %v1272, 0.015625
    %v1274 = vmul.f32 %v1251, %v1251
    %v1275 = vsub.f32 %v1273, %v1274
    %v1276 = vmax.f32 %v1275, 0.0
    %v1277 = vsub.f32 %v1228, %v1251
    %v1278 = vsub.f32 %v1229, %v1251
    %v1279 = vsub.f32 %v1230, %v1251
    %v1280 = vsub.f32 %v1231, %v1251
    %v1281 = vsub.f32 %v1232, %v1251
    %v1282 = vsub.f32 %v1233, %v1251
    %v1283 = vsub.f32 %v1234, %v1251
    %v1284 = vsub.f32 %v1235, %v1251
    %v1285 = vadd.f32 %v1276, 1e-05
    %v1286 = vrsqrt.pop %v1285
    %v1287 = vmul.f32 %v1277, %v1286
    %v1288 = vmul.f32 %v1278, %v1286
    %v1289 = vmul.f32 %v1279, %v1286
    %v1290 = vmul.f32 %v1280, %v1286
    %v1291 = vmul.f32 %v1281, %v1286
    %v1292 = vmul.f32 %v1282, %v1286
    %v1293 = vmul.f32 %v1283, %v1286
    %v1294 = vmul.f32 %v1284, %v1286
    %v1295 = vlaneseq
    %v1296 = vshrl.u32 %v1295, 7
    %v1297 = vsub.s32 0, %v1296
    %v1298 = vrot.slane %v1236, %v1297
    %v1299 = vmul.f32 %v1287, %v1298
    %v1300 = vmul.f32 %v1288, %v1298
    %v1301 = vmul.f32 %v1289, %v1298
    %v1302 = vmul.f32 %v1290, %v1298
    %v1303 = vmul.f32 %v1291, %v1298
    %v1304 = vmul.f32 %v1292, %v1298
    %v1305 = vmul.f32 %v1293, %v1298
    %v1306 = vmul.f32 %v1294, %v1298
    %v1307 = vlaneseq
    %v1308 = vshrl.u32 %v1307, 7
    %v1309 = vsub.s32 0, %v1308
    %v1310 = vrot.slane %v1237, %v1309
    %v1311 = vadd.f32 %v1299, %v1310
    %v1312 = vadd.f32 %v1300, %v1310
    %v1313 = vadd.f32 %v1301, %v1310
    %v1314 = vadd.f32 %v1302, %v1310
    %v1315 = vadd.f32 %v1303, %v1310
    %v1316 = vadd.f32 %v1304, %v1310
    %v1317 = vadd.f32 %v1305, %v1310
    %v1318 = vadd.f32 %v1306, %v1310
    %v1319 = vmax.f32 %v1192, 0.0
    %v1320 = vmax.f32 %v1193, 0.0
    %v1321 = vmax.f32 %v1194, 0.0
    %v1322 = vmax.f32 %v1195, 0.0
    %v1323 = vmax.f32 %v1311, 0.0
    %v1324 = vmax.f32 %v1312, 0.0
    %v1325 = vmax.f32 %v1313, 0.0
    %v1326 = vmax.f32 %v1314, 0.0
    %v1327 = vmax.f32 %v1315, 0.0
    %v1328 = vmax.f32 %v1316, 0.0
    %v1329 = vmax.f32 %v1317, 0.0
    %v1330 = vmax.f32 %v1318, 0.0
    %v1331 = vadd.f32 %v186, %v1319
    %v1332 = vadd.f32 %v189, %v1320
    %v1333 = vadd.f32 %v194, %v1321
    %v1334 = vadd.f32 %v197, %v1322
    %v1335 = vadd.f32 %v258, %v1323
    %v1336 = vadd.f32 %v259, %v1324
    %v1337 = vadd.f32 %v260, %v1325
    %v1338 = vadd.f32 %v261, %v1326
    %v1339 = vadd.f32 %v262, %v1327
    %v1340 = vadd.f32 %v263, %v1328
    %v1341 = vadd.f32 %v264, %v1329
    %v1342 = vadd.f32 %v265, %v1330
    %v1343 = vld [vmem:[#allocation2 + $0x18] sm:$0xff]
    %v1344 = vld [vmem:[#allocation2 + $0x20] sm:$0xff]
    %v1345 = vld [vmem:[#allocation2 + $0x48] sm:$0xff]
    %v1346 = vld [vmem:[#allocation2 + $0x50] sm:$0xff]
    %v1347 = vld [vmem:[#allocation2 + $0x78] sm:$0xff]
    %v1348 = vld [vmem:[#allocation2 + $0x80] sm:$0xff]
    %v1349 = vld [vmem:[#allocation2 + $0xa8] sm:$0xff]
    %v1350 = vld [vmem:[#allocation2 + $0xb0] sm:$0xff]
    %v1351 = vld [vmem:[#allocation2 + $0xd8] sm:$0xff]
    %v1352 = vld [vmem:[#allocation2 + $0xe0] sm:$0xff]
    %v1353 = vld [vmem:[#allocation2 + $0x108] sm:$0xff]
    %v1354 = vld [vmem:[#allocation2 + $0x110] sm:$0xff]
    %v1355 = vld [vmem:[#allocation2 + $0x138] sm:$0xff]
    %v1356 = vld [vmem:[#allocation2 + $0x140] sm:$0xff]
    %v1357 = vld [vmem:[#allocation2 + $0x168] sm:$0xff]
    %v1358 = vld [vmem:[#allocation2 + $0x170] sm:$0xff]
    %v1359 = vld [vmem:[#allocation2 + $0x198] sm:$0xff]
    %v1360 = vld [vmem:[#allocation2 + $0x1a0] sm:$0xff]
    %v1361 = vld [vmem:[#allocation2 + $0x1c8] sm:$0xff]
    %v1362 = vld [vmem:[#allocation2 + $0x1d0] sm:$0xff]
    %v1363 = vld [vmem:[#allocation2 + $0x1f8] sm:$0xff]
    %v1364 = vld [vmem:[#allocation2 + $0x200] sm:$0xff]
    %v1365 = vld [vmem:[#allocation2 + $0x228] sm:$0xff]
    %v1366 = vld [vmem:[#allocation2 + $0x230] sm:$0xff]
    %v1367 = vld [vmem:[#allocation2 + $0x258] sm:$0xff]
    %v1368 = vld [vmem:[#allocation2 + $0x260] sm:$0xff]
    %v1369 = vld [vmem:[#allocation2 + $0x288] sm:$0xff]
    %v1370 = vld [vmem:[#allocation2 + $0x290] sm:$0xff]
    %v1371 = vld [vmem:[#allocation2 + $0x2b8] sm:$0xff]
    %v1372 = vld [vmem:[#allocation2 + $0x2c0] sm:$0xff]
    %v1373 = vld [vmem:[#allocation2 + $0x2e8] sm:$0xff]
    %v1374 = vld [vmem:[#allocation2 + $0x2f0] sm:$0xff]
    %v1375 = vpack.c.bf16 %v1332, %v1331
    %v1376 = vpack.c.bf16 %v1334, %v1333
    %s1377 = scalar_lea.vmem %s6, 1
    %v1378 = vld [vmem:[%s1377] ss:$2 sm:$0xf]
    %v1380 = vlaneseq
    %v1381 = vshrl.u32 %v1380, 7
    %v1382 = vsub.s32 0, %v1381
    %v1383 = vrot.slane %v1378, %v1382
    %v1384 = vlaneseq
    %v1385 = vshrl.u32 %v1384, 7
    %v1386 = vsub.s32 1, %v1385
    %v1387 = vrot.slane %v1378, %v1386
    %v1388 = vlaneseq
    %v1389 = vshrl.u32 %v1388, 7
    %v1390 = vsub.s32 2, %v1389
    %v1391 = vrot.slane %v1378, %v1390
    %v1392 = vlaneseq
    %v1393 = vshrl.u32 %v1392, 7
    %v1394 = vsub.s32 3, %v1393
    %v1395 = vrot.slane %v1378, %v1394
    %v1432 = vunpack.c.l.b16 %v1343
    %v1433 = vunpack.c.h.b16 %v1343
    %v1434 = vunpack.c.l.b16 %v1344
    %v1435 = vunpack.c.h.b16 %v1344
    %v1436 = vunpack.c.l.b16 %v1345
    %v1437 = vunpack.c.h.b16 %v1345
    %v1438 = vunpack.c.l.b16 %v1346
    %v1439 = vunpack.c.h.b16 %v1346
    %v1440 = vunpack.c.l.b16 %v1347
    %v1441 = vunpack.c.h.b16 %v1347
    %v1442 = vunpack.c.l.b16 %v1348
    %v1443 = vunpack.c.h.b16 %v1348
    %v1444 = vunpack.c.l.b16 %v1349
    %v1445 = vunpack.c.h.b16 %v1349
    %v1446 = vunpack.c.l.b16 %v1350
    %v1447 = vunpack.c.h.b16 %v1350
    %v1448 = vunpack.c.l.b16 %v1351
    %v1449 = vunpack.c.h.b16 %v1351
    %v1450 = vunpack.c.l.b16 %v1352
    %v1451 = vunpack.c.h.b16 %v1352
    %v1452 = vunpack.c.l.b16 %v1353
    %v1453 = vunpack.c.h.b16 %v1353
    %v1454 = vunpack.c.l.b16 %v1354
    %v1455 = vunpack.c.h.b16 %v1354
    %v1456 = vunpack.c.l.b16 %v1355
    %v1457 = vunpack.c.h.b16 %v1355
    %v1458 = vunpack.c.l.b16 %v1356
    %v1459 = vunpack.c.h.b16 %v1356
    %v1460 = vunpack.c.l.b16 %v1357
    %v1461 = vunpack.c.h.b16 %v1357
    %v1462 = vunpack.c.l.b16 %v1358
    %v1463 = vunpack.c.h.b16 %v1358
    %v1464 = vunpack.c.l.b16 %v1359
    %v1465 = vunpack.c.h.b16 %v1359
    %v1466 = vunpack.c.l.b16 %v1360
    %v1467 = vunpack.c.h.b16 %v1360
    %v1468 = vunpack.c.l.b16 %v1361
    %v1469 = vunpack.c.h.b16 %v1361
    %v1470 = vunpack.c.l.b16 %v1362
    %v1471 = vunpack.c.h.b16 %v1362
    %v1472 = vunpack.c.l.b16 %v1363
    %v1473 = vunpack.c.h.b16 %v1363
    %v1474 = vunpack.c.l.b16 %v1364
    %v1475 = vunpack.c.h.b16 %v1364
    %v1476 = vunpack.c.l.b16 %v1365
    %v1477 = vunpack.c.h.b16 %v1365
    %v1478 = vunpack.c.l.b16 %v1366
    %v1479 = vunpack.c.h.b16 %v1366
    %v1480 = vunpack.c.l.b16 %v1367
    %v1481 = vunpack.c.h.b16 %v1367
    %v1482 = vunpack.c.l.b16 %v1368
    %v1483 = vunpack.c.h.b16 %v1368
    %v1484 = vunpack.c.l.b16 %v1369
    %v1485 = vunpack.c.h.b16 %v1369
    %v1486 = vunpack.c.l.b16 %v1370
    %v1487 = vunpack.c.h.b16 %v1370
    %v1488 = vunpack.c.l.b16 %v1371
    %v1489 = vunpack.c.h.b16 %v1371
    %v1490 = vunpack.c.l.b16 %v1372
    %v1491 = vunpack.c.h.b16 %v1372
    %v1492 = vunpack.c.l.b16 %v1373
    %v1493 = vunpack.c.h.b16 %v1373
    %v1494 = vunpack.c.l.b16 %v1374
    %v1495 = vunpack.c.h.b16 %v1374
    %v1496 = vpack.c.b16 %v1436, %v1432
    %v1497 = vpack.c.b16 %v1437, %v1433
    %v1498 = vpack.c.b16 %v1438, %v1434
    %v1499 = vpack.c.b16 %v1439, %v1435
    %v1500 = vpack.c.b16 %v1444, %v1440
    %v1501 = vpack.c.b16 %v1445, %v1441
    %v1502 = vpack.c.b16 %v1446, %v1442
    %v1503 = vpack.c.b16 %v1447, %v1443
    %v1504 = vpack.c.b16 %v1452, %v1448
    %v1505 = vpack.c.b16 %v1453, %v1449
    %v1506 = vpack.c.b16 %v1454, %v1450
    %v1507 = vpack.c.b16 %v1455, %v1451
    %v1508 = vpack.c.b16 %v1460, %v1456
    %v1509 = vpack.c.b16 %v1461, %v1457
    %v1510 = vpack.c.b16 %v1462, %v1458
    %v1511 = vpack.c.b16 %v1463, %v1459
    %v1512 = vpack.c.b16 %v1468, %v1464
    %v1513 = vpack.c.b16 %v1469, %v1465
    %v1514 = vpack.c.b16 %v1470, %v1466
    %v1515 = vpack.c.b16 %v1471, %v1467
    %v1516 = vpack.c.b16 %v1476, %v1472
    %v1517 = vpack.c.b16 %v1477, %v1473
    %v1518 = vpack.c.b16 %v1478, %v1474
    %v1519 = vpack.c.b16 %v1479, %v1475
    %v1520 = vpack.c.b16 %v1484, %v1480
    %v1521 = vpack.c.b16 %v1485, %v1481
    %v1522 = vpack.c.b16 %v1486, %v1482
    %v1523 = vpack.c.b16 %v1487, %v1483
    %v1524 = vpack.c.b16 %v1492, %v1488
    %v1525 = vpack.c.b16 %v1493, %v1489
    %v1526 = vpack.c.b16 %v1494, %v1490
    %v1527 = vpack.c.b16 %v1495, %v1491
    %1560 = vmatprep.subr.bf16.mxu0 %v1525
    %1561 = vmatpush1.bf16.msra.mxu0 %v1524
    %1562 = vmatprep.subr.bf16.mxu0 %v1521
    %1563 = vmatpush1.bf16.msra.mxu0 %v1520
    %1564 = vmatprep.subr.bf16.mxu0 %v1517
    %1565 = vmatpush1.bf16.msra.mxu0 %v1516
    %1566 = vmatprep.subr.bf16.mxu0 %v1513
    %1567 = vmatpush1.bf16.msra.mxu0 %v1512
    %1568 = vmatprep.subr.bf16.mxu0 %v1509
    %1569 = vmatpush1.bf16.msra.mxu0 %v1508
    %1570 = vmatprep.subr.bf16.mxu0 %v1505
    %1571 = vmatpush1.bf16.msra.mxu0 %v1504
    %1572 = vmatprep.subr.bf16.mxu0 %v1501
    %1573 = vmatpush1.bf16.msra.mxu0 %v1500
    %1574 = vmatprep.subr.bf16.mxu0 %v1497
    %1575 = vmatpush1.bf16.msra.mxu0 %v1496
    %1576 = vmatprep.subr.bf16.mxu0 0
    %1577 = vmatpush2.bf16.msra.mxu0 0
    %1578 = vmatprep.subr.bf16.mxu0 0
    %1579 = vmatpush2.bf16.msra.mxu0 0
    %1580 = vmatprep.subr.bf16.mxu0 0
    %1581 = vmatpush2.bf16.msra.mxu0 0
    %1582 = vmatprep.subr.bf16.mxu0 0
    %1583 = vmatpush2.bf16.msra.mxu0 0
    %1584 = vmatprep.subr.bf16.mxu0 0
    %1585 = vmatpush2.bf16.msra.mxu0 0
    %1586 = vmatprep.subr.bf16.mxu0 0
    %1587 = vmatpush2.bf16.msra.mxu0 0
    %1588 = vmatprep.subr.bf16.mxu0 0
    %1589 = vmatpush2.bf16.msra.mxu0 0
    %1590 = vmatprep.subr.bf16.mxu0 0
    %1591 = vmatpush2.bf16.msra.mxu0 0
    %1592 = vmatprep.mubr.bf16.mxu0 0
    %1593 = vmatmul.mubr.bf16.gmra.mxu0 %v1375
    %v1594 = vpop.f32.mrf.mxu0
    %v1595 = vadd.f32 %v1383, %v1594
    %v1596 = vpop.f32.mrf.mxu0
    %v1597 = vadd.f32 %v1387, %v1596
    %v1598 = vpop.f32.mrf.mxu0
    %v1599 = vadd.f32 %v1383, %v1598
    %v1600 = vpop.f32.mrf.mxu0
    %v1601 = vadd.f32 %v1387, %v1600
    %1602 = vmatprep.mubr.bf16.mxu0 0
    %1603 = vmatmul.mubr.bf16.gmra.mxu0 %v1376
    %v1604 = vpop.f32.mrf.mxu0
    %v1605 = vadd.f32 %v1383, %v1604
    %v1606 = vpop.f32.mrf.mxu0
    %v1607 = vadd.f32 %v1387, %v1606
    %v1608 = vpop.f32.mrf.mxu0
    %v1609 = vadd.f32 %v1383, %v1608
    %v1610 = vpop.f32.mrf.mxu0
    %v1611 = vadd.f32 %v1387, %v1610
    %1612 = vdwg.mxu0
    %1613 = vmatprep.subr.bf16.mxu0 %v1527
    %1614 = vmatpush1.bf16.msra.mxu0 %v1526
    %1615 = vmatprep.subr.bf16.mxu0 %v1523
    %1616 = vmatpush1.bf16.msra.mxu0 %v1522
    %1617 = vmatprep.subr.bf16.mxu0 %v1519
    %1618 = vmatpush1.bf16.msra.mxu0 %v1518
    %1619 = vmatprep.subr.bf16.mxu0 %v1515
    %1620 = vmatpush1.bf16.msra.mxu0 %v1514
    %1621 = vmatprep.subr.bf16.mxu0 %v1511
    %1622 = vmatpush1.bf16.msra.mxu0 %v1510
    %1623 = vmatprep.subr.bf16.mxu0 %v1507
    %1624 = vmatpush1.bf16.msra.mxu0 %v1506
    %1625 = vmatprep.subr.bf16.mxu0 %v1503
    %1626 = vmatpush1.bf16.msra.mxu0 %v1502
    %1627 = vmatprep.subr.bf16.mxu0 %v1499
    %1628 = vmatpush1.bf16.msra.mxu0 %v1498
    %1629 = vmatprep.subr.bf16.mxu0 0
    %1630 = vmatpush2.bf16.msra.mxu0 0
    %1631 = vmatprep.subr.bf16.mxu0 0
    %1632 = vmatpush2.bf16.msra.mxu0 0
    %1633 = vmatprep.subr.bf16.mxu0 0
    %1634 = vmatpush2.bf16.msra.mxu0 0
    %1635 = vmatprep.subr.bf16.mxu0 0
    %1636 = vmatpush2.bf16.msra.mxu0 0
    %1637 = vmatprep.subr.bf16.mxu0 0
    %1638 = vmatpush2.bf16.msra.mxu0 0
    %1639 = vmatprep.subr.bf16.mxu0 0
    %1640 = vmatpush2.bf16.msra.mxu0 0
    %1641 = vmatprep.subr.bf16.mxu0 0
    %1642 = vmatpush2.bf16.msra.mxu0 0
    %1643 = vmatprep.subr.bf16.mxu0 0
    %1644 = vmatpush2.bf16.msra.mxu0 0
    %1645 = vmatprep.mubr.bf16.mxu0 0
    %1646 = vmatmul.mubr.bf16.gmra.mxu0 %v1375
    %v1647 = vpop.f32.mrf.mxu0
    %v1648 = vadd.f32 %v1391, %v1647
    %v1649 = vpop.f32.mrf.mxu0
    %v1650 = vadd.f32 %v1395, %v1649
    %v1651 = vpop.f32.mrf.mxu0
    %v1652 = vadd.f32 %v1391, %v1651
    %v1653 = vpop.f32.mrf.mxu0
    %v1654 = vadd.f32 %v1395, %v1653
    %1655 = vmatprep.mubr.bf16.mxu0 0
    %1656 = vmatmul.mubr.bf16.gmra.mxu0 %v1376
    %v1657 = vpop.f32.mrf.mxu0
    %v1658 = vadd.f32 %v1391, %v1657
    %v1659 = vpop.f32.mrf.mxu0
    %v1660 = vadd.f32 %v1395, %v1659
    %v1661 = vpop.f32.mrf.mxu0
    %v1662 = vadd.f32 %v1391, %v1661
    %v1663 = vpop.f32.mrf.mxu0
    %v1664 = vadd.f32 %v1395, %v1663
    %1665 = vdwg.mxu0
    %v1666 = vld [vmem:[#allocation2 + $0x28] sm:$0xf]
    %v1667 = vld [vmem:[#allocation2 + $0x58] sm:$0xf]
    %v1668 = vld [vmem:[#allocation2 + $0x88] sm:$0xf]
    %v1669 = vld [vmem:[#allocation2 + $0xb8] sm:$0xf]
    %v1670 = vld [vmem:[#allocation2 + $0xe8] sm:$0xf]
    %v1671 = vld [vmem:[#allocation2 + $0x118] sm:$0xf]
    %v1672 = vld [vmem:[#allocation2 + $0x148] sm:$0xf]
    %v1673 = vld [vmem:[#allocation2 + $0x178] sm:$0xf]
    %v1674 = vld [vmem:[#allocation2 + $0x1a8] sm:$0xf]
    %v1675 = vld [vmem:[#allocation2 + $0x1d8] sm:$0xf]
    %v1676 = vld [vmem:[#allocation2 + $0x208] sm:$0xf]
    %v1677 = vld [vmem:[#allocation2 + $0x238] sm:$0xf]
    %v1678 = vld [vmem:[#allocation2 + $0x268] sm:$0xf]
    %v1679 = vld [vmem:[#allocation2 + $0x298] sm:$0xf]
    %v1680 = vld [vmem:[#allocation2 + $0x2c8] sm:$0xf]
    %v1681 = vld [vmem:[#allocation2 + $0x2f8] sm:$0xf]
    %v1682 = vpack.c.bf16 %v1336, %v1335
    %v1683 = vpack.c.bf16 %v1338, %v1337
    %v1684 = vpack.c.bf16 %v1340, %v1339
    %v1685 = vpack.c.bf16 %v1342, %v1341
    %v1686 = vld [vmem:[%s7 + $0x8] sm:$0x1]
    %v1687 = vlaneseq
    %v1688 = vshrl.u32 %v1687, 7
    %v1689 = vsub.s32 0, %v1688
    %v1690 = vrot.slane %v1686, %v1689
    %v1707 = vunpack.c.l.b16 %v1666
    %v1708 = vunpack.c.l.b16 %v1667
    %v1709 = vunpack.c.l.b16 %v1668
    %v1710 = vunpack.c.l.b16 %v1669
    %v1711 = vunpack.c.l.b16 %v1670
    %v1712 = vunpack.c.l.b16 %v1671
    %v1713 = vunpack.c.l.b16 %v1672
    %v1714 = vunpack.c.l.b16 %v1673
    %v1715 = vunpack.c.l.b16 %v1674
    %v1716 = vunpack.c.l.b16 %v1675
    %v1717 = vunpack.c.l.b16 %v1676
    %v1718 = vunpack.c.l.b16 %v1677
    %v1719 = vunpack.c.l.b16 %v1678
    %v1720 = vunpack.c.l.b16 %v1679
    %v1721 = vunpack.c.l.b16 %v1680
    %v1722 = vunpack.c.l.b16 %v1681
    %v1723 = vpack.c.b16 %v1708, %v1707
    %v1724 = vpack.c.b16 %v1710, %v1709
    %v1725 = vpack.c.b16 %v1712, %v1711
    %v1726 = vpack.c.b16 %v1714, %v1713
    %v1727 = vpack.c.b16 %v1716, %v1715
    %v1728 = vpack.c.b16 %v1718, %v1717
    %v1729 = vpack.c.b16 %v1720, %v1719
    %v1730 = vpack.c.b16 %v1722, %v1721
    %1739 = vmatprep.subr.bf16.mxu0 0
    %1740 = vmatpush1.bf16.msra.mxu0 %v1730
    %1741 = vmatprep.subr.bf16.mxu0 0
    %1742 = vmatpush1.bf16.msra.mxu0 %v1729
    %1743 = vmatprep.subr.bf16.mxu0 0
    %1744 = vmatpush1.bf16.msra.mxu0 %v1728
    %1745 = vmatprep.subr.bf16.mxu0 0
    %1746 = vmatpush1.bf16.msra.mxu0 %v1727
    %1747 = vmatprep.subr.bf16.mxu0 0
    %1748 = vmatpush1.bf16.msra.mxu0 %v1726
    %1749 = vmatprep.subr.bf16.mxu0 0
    %1750 = vmatpush1.bf16.msra.mxu0 %v1725
    %1751 = vmatprep.subr.bf16.mxu0 0
    %1752 = vmatpush1.bf16.msra.mxu0 %v1724
    %1753 = vmatprep.subr.bf16.mxu0 0
    %1754 = vmatpush1.bf16.msra.mxu0 %v1723
    %1755 = vmatprep.subr.bf16.mxu0 0
    %1756 = vmatpush2.bf16.msra.mxu0 0
    %1757 = vmatprep.subr.bf16.mxu0 0
    %1758 = vmatpush2.bf16.msra.mxu0 0
    %1759 = vmatprep.subr.bf16.mxu0 0
    %1760 = vmatpush2.bf16.msra.mxu0 0
    %1761 = vmatprep.subr.bf16.mxu0 0
    %1762 = vmatpush2.bf16.msra.mxu0 0
    %1763 = vmatprep.subr.bf16.mxu0 0
    %1764 = vmatpush2.bf16.msra.mxu0 0
    %1765 = vmatprep.subr.bf16.mxu0 0
    %1766 = vmatpush2.bf16.msra.mxu0 0
    %1767 = vmatprep.subr.bf16.mxu0 0
    %1768 = vmatpush2.bf16.msra.mxu0 0
    %1769 = vmatprep.subr.bf16.mxu0 0
    %1770 = vmatpush2.bf16.msra.mxu0 0
    %1771 = vmatprep.mubr.bf16.mxu0 0
    %1772 = vmatmul.mubr.bf16.gmra.mxu0 %v1682
    %v1773 = vpop.f32.mrf.mxu0
    %v1774 = vadd.f32 %v1690, %v1773
    %v1775 = vpop.f32.mrf.mxu0
    %v1776 = vpop.f32.mrf.mxu0
    %v1777 = vadd.f32 %v1690, %v1776
    %v1778 = vpop.f32.mrf.mxu0
    %1779 = vmatprep.mubr.bf16.mxu0 0
    %1780 = vmatmul.mubr.bf16.gmra.mxu0 %v1683
    %v1781 = vpop.f32.mrf.mxu0
    %v1782 = vadd.f32 %v1690, %v1781
    %v1783 = vpop.f32.mrf.mxu0
    %v1784 = vpop.f32.mrf.mxu0
    %v1785 = vadd.f32 %v1690, %v1784
    %v1786 = vpop.f32.mrf.mxu0
    %1787 = vmatprep.mubr.bf16.mxu0 0
    %1788 = vmatmul.mubr.bf16.gmra.mxu0 %v1684
    %v1789 = vpop.f32.mrf.mxu0
    %v1790 = vadd.f32 %v1690, %v1789
    %v1791 = vpop.f32.mrf.mxu0
    %v1792 = vpop.f32.mrf.mxu0
    %v1793 = vadd.f32 %v1690, %v1792
    %v1794 = vpop.f32.mrf.mxu0
    %1795 = vmatprep.mubr.bf16.mxu0 0
    %1796 = vmatmul.mubr.bf16.gmra.mxu0 %v1685
    %v1797 = vpop.f32.mrf.mxu0
    %v1798 = vadd.f32 %v1690, %v1797
    %v1799 = vpop.f32.mrf.mxu0
    %v1800 = vpop.f32.mrf.mxu0
    %v1801 = vadd.f32 %v1690, %v1800
    %v1802 = vpop.f32.mrf.mxu0
    %1803 = vdwg.mxu0
    %v1804 = vpack.c.bf16 %v1601, %v1597
    %v1805 = vpack.c.bf16 %v1652, %v1648
    %v1806 = vpack.c.bf16 %v1611, %v1607
    %v1807 = vpack.c.bf16 %v1662, %v1658
    %1808 = vmatprep.subr.bf16.mxu0 0
    %1809 = vmatpush1.bf16.msra.mxu0 0
    %1810 = vmatprep.subr.bf16.mxu0 0
    %1811 = vmatpush1.bf16.msra.mxu0 0
    %1812 = vmatprep.subr.bf16.mxu0 0
    %1813 = vmatpush1.bf16.msra.mxu0 0
    %1814 = vmatprep.subr.bf16.mxu0 0
    %1815 = vmatpush1.bf16.msra.mxu0 0
    %1816 = vmatprep.subr.bf16.mxu0 0
    %1817 = vmatpush1.bf16.msra.mxu0 0
    %1818 = vmatprep.subr.bf16.mxu0 0
    %1819 = vmatpush1.bf16.msra.mxu0 0
    %1820 = vmatprep.subr.bf16.mxu0 %v1807
    %1821 = vmatpush1.bf16.msra.mxu0 %v1806
    %1822 = vmatprep.subr.bf16.mxu0 %v1805
    %1823 = vmatpush1.bf16.msra.mxu0 %v1804
    %1824 = vmatprep.subr.bf16.mxu0 0
    %1825 = vmatpush2.bf16.msra.mxu0 0
    %1826 = vmatprep.subr.bf16.mxu0 0
    %1827 = vmatpush2.bf16.msra.mxu0 0
    %1828 = vmatprep.subr.bf16.mxu0 0
    %1829 = vmatpush2.bf16.msra.mxu0 0
    %1830 = vmatprep.subr.bf16.mxu0 0
    %1831 = vmatpush2.bf16.msra.mxu0 0
    %1832 = vmatprep.subr.bf16.mxu0 0
    %1833 = vmatpush2.bf16.msra.mxu0 0
    %1834 = vmatprep.subr.bf16.mxu0 0
    %1835 = vmatpush2.bf16.msra.mxu0 0
    %1836 = vmatprep.subr.bf16.mxu0 0
    %1837 = vmatpush2.bf16.msra.mxu0 0
    %1838 = vmatprep.subr.bf16.mxu0 0
    %1839 = vmatpush2.bf16.msra.mxu0 0
    %1840 = vmatprep.mubr.bf16.mxu0 0
    %1841 = vmatmul.mubr.bf16.gmra.mxu0 %v752
    %v1842 = vpop.f32.mrf.mxu0
    %v1843 = vadd.f32 0.0, %v1842
    %v1844 = vpop.f32.mrf.mxu0
    %v1845 = vadd.f32 0.0, %v1844
    %v1846 = vpop.f32.mrf.mxu0
    %v1847 = vadd.f32 0.0, %v1846
    %v1848 = vpop.f32.mrf.mxu0
    %v1849 = vadd.f32 0.0, %v1848
    %1850 = vmatprep.mubr.bf16.mxu0 0
    %1851 = vmatmul.mubr.bf16.gmra.mxu0 %v755
    %v1852 = vpop.f32.mrf.mxu0
    %v1853 = vadd.f32 0.0, %v1852
    %v1854 = vpop.f32.mrf.mxu0
    %v1855 = vadd.f32 0.0, %v1854
    %v1856 = vpop.f32.mrf.mxu0
    %v1857 = vadd.f32 0.0, %v1856
    %v1858 = vpop.f32.mrf.mxu0
    %v1859 = vadd.f32 0.0, %v1858
    %1860 = vmatprep.mubr.bf16.mxu0 0
    %1861 = vmatmul.mubr.bf16.gmra.mxu0 %v758
    %v1862 = vpop.f32.mrf.mxu0
    %v1863 = vadd.f32 0.0, %v1862
    %v1864 = vpop.f32.mrf.mxu0
    %v1865 = vadd.f32 0.0, %v1864
    %v1866 = vpop.f32.mrf.mxu0
    %v1867 = vadd.f32 0.0, %v1866
    %v1868 = vpop.f32.mrf.mxu0
    %v1869 = vadd.f32 0.0, %v1868
    %1870 = vmatprep.mubr.bf16.mxu0 0
    %1871 = vmatmul.mubr.bf16.gmra.mxu0 %v761
    %v1872 = vpop.f32.mrf.mxu0
    %v1873 = vadd.f32 0.0, %v1872
    %v1874 = vpop.f32.mrf.mxu0
    %v1875 = vadd.f32 0.0, %v1874
    %v1876 = vpop.f32.mrf.mxu0
    %v1877 = vadd.f32 0.0, %v1876
    %v1878 = vpop.f32.mrf.mxu0
    %v1879 = vadd.f32 0.0, %v1878
    %1880 = vdwg.mxu0
    %v1881 = vpack.c.bf16 %v1654, %v1650
    %v1882 = vpack.c.bf16 %v1664, %v1660
    %1883 = vmatprep.subr.bf16.mxu0 0
    %1884 = vmatpush1.bf16.msra.mxu0 0
    %1885 = vmatprep.subr.bf16.mxu0 0
    %1886 = vmatpush1.bf16.msra.mxu0 0
    %1887 = vmatprep.subr.bf16.mxu0 0
    %1888 = vmatpush1.bf16.msra.mxu0 0
    %1889 = vmatprep.subr.bf16.mxu0 0
    %1890 = vmatpush1.bf16.msra.mxu0 0
    %1891 = vmatprep.subr.bf16.mxu0 0
    %1892 = vmatpush1.bf16.msra.mxu0 0
    %1893 = vmatprep.subr.bf16.mxu0 0
    %1894 = vmatpush1.bf16.msra.mxu0 0
    %1895 = vmatprep.subr.bf16.mxu0 0
    %1896 = vmatpush1.bf16.msra.mxu0 %v1882
    %1897 = vmatprep.subr.bf16.mxu0 0
    %1898 = vmatpush1.bf16.msra.mxu0 %v1881
    %1899 = vmatprep.subr.bf16.mxu0 0
    %1900 = vmatpush2.bf16.msra.mxu0 0
    %1901 = vmatprep.subr.bf16.mxu0 0
    %1902 = vmatpush2.bf16.msra.mxu0 0
    %1903 = vmatprep.subr.bf16.mxu0 0
    %1904 = vmatpush2.bf16.msra.mxu0 0
    %1905 = vmatprep.subr.bf16.mxu0 0
    %1906 = vmatpush2.bf16.msra.mxu0 0
    %1907 = vmatprep.subr.bf16.mxu0 0
    %1908 = vmatpush2.bf16.msra.mxu0 0
    %1909 = vmatprep.subr.bf16.mxu0 0
    %1910 = vmatpush2.bf16.msra.mxu0 0
    %1911 = vmatprep.subr.bf16.mxu0 0
    %1912 = vmatpush2.bf16.msra.mxu0 0
    %1913 = vmatprep.subr.bf16.mxu0 0
    %1914 = vmatpush2.bf16.msra.mxu0 0
    %1915 = vmatprep.mubr.bf16.mxu0 0
    %1916 = vmatmul.mubr.bf16.gmra.mxu0 %v859
    %v1917 = vpop.f32.mrf.mxu0
    %v1918 = vadd.f32 0.0, %v1917
    %v1919 = vpop.f32.mrf.mxu0
    %v1920 = vpop.f32.mrf.mxu0
    %v1921 = vadd.f32 0.0, %v1920
    %v1922 = vpop.f32.mrf.mxu0
    %1923 = vmatprep.mubr.bf16.mxu0 0
    %1924 = vmatmul.mubr.bf16.gmra.mxu0 %v862
    %v1925 = vpop.f32.mrf.mxu0
    %v1926 = vadd.f32 0.0, %v1925
    %v1927 = vpop.f32.mrf.mxu0
    %v1928 = vpop.f32.mrf.mxu0
    %v1929 = vadd.f32 0.0, %v1928
    %v1930 = vpop.f32.mrf.mxu0
    %1931 = vmatprep.mubr.bf16.mxu0 0
    %1932 = vmatmul.mubr.bf16.gmra.mxu0 %v865
    %v1933 = vpop.f32.mrf.mxu0
    %v1934 = vadd.f32 0.0, %v1933
    %v1935 = vpop.f32.mrf.mxu0
    %v1936 = vpop.f32.mrf.mxu0
    %v1937 = vadd.f32 0.0, %v1936
    %v1938 = vpop.f32.mrf.mxu0
    %1939 = vmatprep.mubr.bf16.mxu0 0
    %1940 = vmatmul.mubr.bf16.gmra.mxu0 %v868
    %v1941 = vpop.f32.mrf.mxu0
    %v1942 = vadd.f32 0.0, %v1941
    %v1943 = vpop.f32.mrf.mxu0
    %v1944 = vpop.f32.mrf.mxu0
    %v1945 = vadd.f32 0.0, %v1944
    %v1946 = vpop.f32.mrf.mxu0
    %1947 = vdwg.mxu0
    %v1948 = vadd.f32 %v1774, %v1843
    %v1949 = vadd.f32 %v1777, %v1847
    %v1950 = vadd.f32 %v1782, %v1853
    %v1951 = vadd.f32 %v1785, %v1857
    %v1952 = vadd.f32 %v1790, %v1863
    %v1953 = vadd.f32 %v1793, %v1867
    %v1954 = vadd.f32 %v1798, %v1873
    %v1955 = vadd.f32 %v1801, %v1877
    %v1956 = vadd.f32 %v1948, %v1918
    %v1957 = vadd.f32 %v1949, %v1921
    %v1958 = vadd.f32 %v1950, %v1926
    %v1959 = vadd.f32 %v1951, %v1929
    %v1960 = vadd.f32 %v1952, %v1934
    %v1961 = vadd.f32 %v1953, %v1937
    %v1962 = vadd.f32 %v1954, %v1942
    %v1963 = vadd.f32 %v1955, %v1945
    %v1964 = vxor.u32 %v1956, 2147483648
    %v1965 = vxor.u32 %v1957, 2147483648
    %v1966 = vxor.u32 %v1958, 2147483648
    %v1967 = vxor.u32 %v1959, 2147483648
    %v1968 = vxor.u32 %v1960, 2147483648
    %v1969 = vxor.u32 %v1961, 2147483648
    %v1970 = vxor.u32 %v1962, 2147483648
    %v1971 = vxor.u32 %v1963, 2147483648
    %v1972 = vmul.f32 %v1964, 1.442695
    %v1973 = vpow.pop %v1972
    %v1974 = vmul.f32 %v1965, 1.442695
    %v1975 = vpow.pop %v1974
    %v1976 = vmul.f32 %v1966, 1.442695
    %v1977 = vpow.pop %v1976
    %v1978 = vmul.f32 %v1967, 1.442695
    %v1979 = vpow.pop %v1978
    %v1980 = vmul.f32 %v1968, 1.442695
    %v1981 = vpow.pop %v1980
    %v1982 = vmul.f32 %v1969, 1.442695
    %v1983 = vpow.pop %v1982
    %v1984 = vmul.f32 %v1970, 1.442695
    %v1985 = vpow.pop %v1984
    %v1986 = vmul.f32 %v1971, 1.442695
    %v1987 = vpow.pop %v1986
    %v1988 = vadd.f32 %v1973, 1.0
    %v1989 = vadd.f32 %v1975, 1.0
    %v1990 = vadd.f32 %v1977, 1.0
    %v1991 = vadd.f32 %v1979, 1.0
    %v1992 = vadd.f32 %v1981, 1.0
    %v1993 = vadd.f32 %v1983, 1.0
    %v1994 = vadd.f32 %v1985, 1.0
    %v1995 = vadd.f32 %v1987, 1.0
    %v1996 = vrcp.pop %v1988
    %v1997 = vmul.f32 1.0, %v1996
    %v1998 = vrcp.pop %v1989
    %v1999 = vmul.f32 1.0, %v1998
    %v2000 = vrcp.pop %v1990
    %v2001 = vmul.f32 1.0, %v2000
    %v2002 = vrcp.pop %v1991
    %v2003 = vmul.f32 1.0, %v2002
    %v2004 = vrcp.pop %v1992
    %v2005 = vmul.f32 1.0, %v2004
    %v2006 = vrcp.pop %v1993
    %v2007 = vmul.f32 1.0, %v2006
    %v2008 = vrcp.pop %v1994
    %v2009 = vmul.f32 1.0, %v2008
    %v2010 = vrcp.pop %v1995
    %v2011 = vmul.f32 1.0, %v2010
    %v2012 = vmax.f32 %v1997, 0.0001
    %v2013 = vmax.f32 %v1999, 0.0001
    %v2014 = vmax.f32 %v2001, 0.0001
    %v2015 = vmax.f32 %v2003, 0.0001
    %v2016 = vmax.f32 %v2005, 0.0001
    %v2017 = vmax.f32 %v2007, 0.0001
    %v2018 = vmax.f32 %v2009, 0.0001
    %v2019 = vmax.f32 %v2011, 0.0001
    %v2020 = vmin.f32 %v2012, 0.9999
    %v2021 = vmin.f32 %v2013, 0.9999
    %v2022 = vmin.f32 %v2014, 0.9999
    %v2023 = vmin.f32 %v2015, 0.9999
    %v2024 = vmin.f32 %v2016, 0.9999
    %v2025 = vmin.f32 %v2017, 0.9999
    %v2026 = vmin.f32 %v2018, 0.9999
    %v2027 = vmin.f32 %v2019, 0.9999
    %v2028 = vmul.f32 %v2020, %v1845
    %v2029 = vmul.f32 %v2021, %v1849
    %v2030 = vmul.f32 %v2022, %v1855
    %v2031 = vmul.f32 %v2023, %v1859
    %v2032 = vmul.f32 %v2024, %v1865
    %v2033 = vmul.f32 %v2025, %v1869
    %v2034 = vmul.f32 %v2026, %v1875
    %v2035 = vmul.f32 %v2027, %v1879
    %v2036 = vpack.c.bf16 %v2029, %v2028
    %v2037 = vpack.c.bf16 %v2021, %v2020
    %v2038 = vpack.c.bf16 %v2031, %v2030
    %v2039 = vpack.c.bf16 %v2023, %v2022
    %v2040 = vpack.c.bf16 %v2033, %v2032
    %v2041 = vpack.c.bf16 %v2025, %v2024
    %v2042 = vpack.c.bf16 %v2035, %v2034
    %v2043 = vpack.c.bf16 %v2027, %v2026
    %2044 = vmatprep.subr.bf16.mxu0 0
    %2045 = vmatpush1.bf16.msra.mxu0 0
    %2046 = vmatprep.subr.bf16.mxu0 0
    %2047 = vmatpush1.bf16.msra.mxu0 0
    %2048 = vmatprep.subr.bf16.mxu0 0
    %2049 = vmatpush1.bf16.msra.mxu0 0
    %2050 = vmatprep.subr.bf16.mxu0 0
    %2051 = vmatpush1.bf16.msra.mxu0 0
    %2052 = vmatprep.subr.bf16.mxu0 %v2043
    %2053 = vmatpush1.bf16.msra.mxu0 %v2042
    %2054 = vmatprep.subr.bf16.mxu0 %v2041
    %2055 = vmatpush1.bf16.msra.mxu0 %v2040
    %2056 = vmatprep.subr.bf16.mxu0 %v2039
    %2057 = vmatpush1.bf16.msra.mxu0 %v2038
    %2058 = vmatprep.subr.bf16.mxu0 %v2037
    %2059 = vmatpush1.bf16.msra.mxu0 %v2036
    %2060 = vmatprep.subr.bf16.mxu0 0
    %2061 = vmatpush2.bf16.msra.mxu0 0
    %2062 = vmatprep.subr.bf16.mxu0 0
    %2063 = vmatpush2.bf16.msra.mxu0 0
    %2064 = vmatprep.subr.bf16.mxu0 0
    %2065 = vmatpush2.bf16.msra.mxu0 0
    %2066 = vmatprep.subr.bf16.mxu0 0
    %2067 = vmatpush2.bf16.msra.mxu0 0
    %2068 = vmatprep.subr.bf16.mxu0 0
    %2069 = vmatpush2.bf16.msra.mxu0 0
    %2070 = vmatprep.subr.bf16.mxu0 0
    %2071 = vmatpush2.bf16.msra.mxu0 0
    %2072 = vmatprep.subr.bf16.mxu0 0
    %2073 = vmatpush2.bf16.msra.mxu0 0
    %2074 = vmatprep.subr.bf16.mxu0 0
    %2075 = vmatpush2.bf16.msra.mxu0 0
    %2076 = vmatprep.mubr.bf16.mxu0 0
    %2077 = vmatmul.mubr.bf16.gmra.mxu0 %v1043
    %v2078 = vpop.f32.mrf.mxu0
    %v2079 = vadd.f32 0.0, %v2078
    %v2080 = vpop.f32.mrf.mxu0
    %v2081 = vadd.f32 0.0, %v2080
    %v2082 = vpop.f32.mrf.mxu0
    %v2083 = vadd.f32 0.0, %v2082
    %v2084 = vpop.f32.mrf.mxu0
    %v2085 = vadd.f32 0.0, %v2084
    %2086 = vmatprep.mubr.bf16.mxu0 0
    %2087 = vmatmul.mubr.bf16.gmra.mxu0 %v1046
    %v2088 = vpop.f32.mrf.mxu0
    %v2089 = vadd.f32 0.0, %v2088
    %v2090 = vpop.f32.mrf.mxu0
    %v2091 = vadd.f32 0.0, %v2090
    %v2092 = vpop.f32.mrf.mxu0
    %v2093 = vadd.f32 0.0, %v2092
    %v2094 = vpop.f32.mrf.mxu0
    %v2095 = vadd.f32 0.0, %v2094
    %2096 = vdwg.mxu0
    %v2097 = vmax.f32 %v2081, 1e-06
    %v2098 = vmax.f32 %v2085, 1e-06
    %v2099 = vmax.f32 %v2091, 1e-06
    %v2100 = vmax.f32 %v2095, 1e-06
    %v2101 = vrcp.pop %v2097
    %v2102 = vrcp.pop %v2098
    %v2103 = vrcp.pop %v2099
    %v2104 = vrcp.pop %v2100
    %v2105 = vmul.f32 %v2079, %v2101
    %v2106 = vmul.f32 %v2083, %v2102
    %v2107 = vmul.f32 %v2089, %v2103
    %v2108 = vmul.f32 %v2093, %v2104
    %v2109 = vadd.f32 %v1595, %v2105
    %v2110 = vadd.f32 %v1599, %v2106
    %v2111 = vadd.f32 %v1605, %v2107
    %v2112 = vadd.f32 %v1609, %v2108
    %v2113 = vmul.f32 %v2109, %v1120
    %v2114 = vmul.f32 %v2110, %v1125
    %v2115 = vmul.f32 %v2111, %v1130
    %v2116 = vmul.f32 %v2112, %v1135
    %v2117 = vld [vmem:[%s7 + $0x9] sm:$0x1]
    %v2118 = vld [vmem:[%s7 + $0xa] sm:$0x1]
    %v2119 = vadd.f32 %v2113, %v2114
    %v2120 = vadd.f32 %v2119, %v2115
    %v2121 = vadd.f32 %v2120, %v2116
    %v2122 = vrot.slane %v2121, 4
    %v2123 = vadd.f32 %v2121, %v2122
    %v2124 = vrot.slane %v2123, 2
    %v2125 = vadd.f32 %v2123, %v2124
    %v2126 = vrot.slane %v2125, 1
    %v2127 = vadd.f32 %v2125, %v2126
    %v2128 = vmul.f32 %v2127, 0.03125
    %v2129 = vmul.f32 %v2113, %v2113
    %v2130 = vmul.f32 %v2114, %v2114
    %v2131 = vmul.f32 %v2115, %v2115
    %v2132 = vmul.f32 %v2116, %v2116
    %v2133 = vadd.f32 %v2129, %v2130
    %v2134 = vadd.f32 %v2133, %v2131
    %v2135 = vadd.f32 %v2134, %v2132
    %v2136 = vrot.slane %v2135, 4
    %v2137 = vadd.f32 %v2135, %v2136
    %v2138 = vrot.slane %v2137, 2
    %v2139 = vadd.f32 %v2137, %v2138
    %v2140 = vrot.slane %v2139, 1
    %v2141 = vadd.f32 %v2139, %v2140
    %v2142 = vmul.f32 %v2141, 0.03125
    %v2143 = vmul.f32 %v2128, %v2128
    %v2144 = vsub.f32 %v2142, %v2143
    %v2145 = vmax.f32 %v2144, 0.0
    %v2146 = vsub.f32 %v2113, %v2128
    %v2147 = vsub.f32 %v2114, %v2128
    %v2148 = vsub.f32 %v2115, %v2128
    %v2149 = vsub.f32 %v2116, %v2128
    %v2150 = vadd.f32 %v2145, 1e-05
    %v2151 = vrsqrt.pop %v2150
    %v2152 = vmul.f32 %v2146, %v2151
    %v2153 = vmul.f32 %v2147, %v2151
    %v2154 = vmul.f32 %v2148, %v2151
    %v2155 = vmul.f32 %v2149, %v2151
    %v2156 = vlaneseq
    %v2157 = vshrl.u32 %v2156, 7
    %v2158 = vsub.s32 0, %v2157
    %v2159 = vrot.slane %v2117, %v2158
    %v2160 = vmul.f32 %v2152, %v2159
    %v2161 = vmul.f32 %v2153, %v2159
    %v2162 = vmul.f32 %v2154, %v2159
    %v2163 = vmul.f32 %v2155, %v2159
    %v2164 = vlaneseq
    %v2165 = vshrl.u32 %v2164, 7
    %v2166 = vsub.s32 0, %v2165
    %v2167 = vrot.slane %v2118, %v2166
    %v2168 = vadd.f32 %v2160, %v2167
    %v2169 = vadd.f32 %v2161, %v2167
    %v2170 = vadd.f32 %v2162, %v2167
    %v2171 = vadd.f32 %v2163, %v2167
    %v2172 = vmax.f32 %v2168, 0.0
    %v2173 = vmax.f32 %v2169, 0.0
    %v2174 = vmax.f32 %v2170, 0.0
    %v2175 = vmax.f32 %v2171, 0.0
    %v2176 = vadd.f32 %v1331, %v2172
    %v2177 = vadd.f32 %v1332, %v2173
    %v2178 = vadd.f32 %v1333, %v2174
    %v2179 = vadd.f32 %v1334, %v2175
    %v2180 = vld [vmem:[#allocation2 + $0x2c] sm:$0xf]
    %v2181 = vld [vmem:[#allocation2 + $0x5c] sm:$0xf]
    %v2182 = vld [vmem:[#allocation2 + $0x8c] sm:$0xf]
    %v2183 = vld [vmem:[#allocation2 + $0xbc] sm:$0xf]
    %v2184 = vld [vmem:[#allocation2 + $0xec] sm:$0xf]
    %v2185 = vld [vmem:[#allocation2 + $0x11c] sm:$0xf]
    %v2186 = vld [vmem:[#allocation2 + $0x14c] sm:$0xf]
    %v2187 = vld [vmem:[#allocation2 + $0x17c] sm:$0xf]
    %v2188 = vld [vmem:[#allocation2 + $0x1ac] sm:$0xf]
    %v2189 = vld [vmem:[#allocation2 + $0x1dc] sm:$0xf]
    %v2190 = vld [vmem:[#allocation2 + $0x20c] sm:$0xf]
    %v2191 = vld [vmem:[#allocation2 + $0x23c] sm:$0xf]
    %v2192 = vld [vmem:[#allocation2 + $0x26c] sm:$0xf]
    %v2193 = vld [vmem:[#allocation2 + $0x29c] sm:$0xf]
    %v2194 = vld [vmem:[#allocation2 + $0x2cc] sm:$0xf]
    %v2195 = vld [vmem:[#allocation2 + $0x2fc] sm:$0xf]
    %v2196 = vpack.c.bf16 %v2177, %v2176
    %v2197 = vpack.c.bf16 %v2179, %v2178
    %v2198 = vld [vmem:[%s7 + $0xd] sm:$0x1]
    %v2199 = vlaneseq
    %v2200 = vshrl.u32 %v2199, 7
    %v2201 = vsub.s32 0, %v2200
    %v2202 = vrot.slane %v2198, %v2201
    %v2219 = vunpack.c.l.b16 %v2180
    %v2220 = vunpack.c.l.b16 %v2181
    %v2221 = vunpack.c.l.b16 %v2182
    %v2222 = vunpack.c.l.b16 %v2183
    %v2223 = vunpack.c.l.b16 %v2184
    %v2224 = vunpack.c.l.b16 %v2185
    %v2225 = vunpack.c.l.b16 %v2186
    %v2226 = vunpack.c.l.b16 %v2187
    %v2227 = vunpack.c.l.b16 %v2188
    %v2228 = vunpack.c.l.b16 %v2189
    %v2229 = vunpack.c.l.b16 %v2190
    %v2230 = vunpack.c.l.b16 %v2191
    %v2231 = vunpack.c.l.b16 %v2192
    %v2232 = vunpack.c.l.b16 %v2193
    %v2233 = vunpack.c.l.b16 %v2194
    %v2234 = vunpack.c.l.b16 %v2195
    %v2235 = vpack.c.b16 %v2220, %v2219
    %v2236 = vpack.c.b16 %v2222, %v2221
    %v2237 = vpack.c.b16 %v2224, %v2223
    %v2238 = vpack.c.b16 %v2226, %v2225
    %v2239 = vpack.c.b16 %v2228, %v2227
    %v2240 = vpack.c.b16 %v2230, %v2229
    %v2241 = vpack.c.b16 %v2232, %v2231
    %v2242 = vpack.c.b16 %v2234, %v2233
    %2251 = vmatprep.subr.bf16.mxu0 0
    %2252 = vmatpush1.bf16.msra.mxu0 %v2242
    %2253 = vmatprep.subr.bf16.mxu0 0
    %2254 = vmatpush1.bf16.msra.mxu0 %v2241
    %2255 = vmatprep.subr.bf16.mxu0 0
    %2256 = vmatpush1.bf16.msra.mxu0 %v2240
    %2257 = vmatprep.subr.bf16.mxu0 0
    %2258 = vmatpush1.bf16.msra.mxu0 %v2239
    %2259 = vmatprep.subr.bf16.mxu0 0
    %2260 = vmatpush1.bf16.msra.mxu0 %v2238
    %2261 = vmatprep.subr.bf16.mxu0 0
    %2262 = vmatpush1.bf16.msra.mxu0 %v2237
    %2263 = vmatprep.subr.bf16.mxu0 0
    %2264 = vmatpush1.bf16.msra.mxu0 %v2236
    %2265 = vmatprep.subr.bf16.mxu0 0
    %2266 = vmatpush1.bf16.msra.mxu0 %v2235
    %2267 = vmatprep.subr.bf16.mxu0 0
    %2268 = vmatpush2.bf16.msra.mxu0 0
    %2269 = vmatprep.subr.bf16.mxu0 0
    %2270 = vmatpush2.bf16.msra.mxu0 0
    %2271 = vmatprep.subr.bf16.mxu0 0
    %2272 = vmatpush2.bf16.msra.mxu0 0
    %2273 = vmatprep.subr.bf16.mxu0 0
    %2274 = vmatpush2.bf16.msra.mxu0 0
    %2275 = vmatprep.subr.bf16.mxu0 0
    %2276 = vmatpush2.bf16.msra.mxu0 0
    %2277 = vmatprep.subr.bf16.mxu0 0
    %2278 = vmatpush2.bf16.msra.mxu0 0
    %2279 = vmatprep.subr.bf16.mxu0 0
    %2280 = vmatpush2.bf16.msra.mxu0 0
    %2281 = vmatprep.subr.bf16.mxu0 0
    %2282 = vmatpush2.bf16.msra.mxu0 0
    %2283 = vmatprep.mubr.bf16.mxu0 0
    %2284 = vmatmul.mubr.bf16.gmra.mxu0 %v2196
    %v2285 = vpop.f32.mrf.mxu0
    %v2286 = vadd.f32 %v2202, %v2285
    %v2287 = vpop.f32.mrf.mxu0
    %v2288 = vpop.f32.mrf.mxu0
    %v2289 = vadd.f32 %v2202, %v2288
    %v2290 = vpop.f32.mrf.mxu0
    %2291 = vmatprep.mubr.bf16.mxu0 0
    %2292 = vmatmul.mubr.bf16.gmra.mxu0 %v2197
    %v2293 = vpop.f32.mrf.mxu0
    %v2294 = vadd.f32 %v2202, %v2293
    %v2295 = vpop.f32.mrf.mxu0
    %v2296 = vpop.f32.mrf.mxu0
    %v2297 = vadd.f32 %v2202, %v2296
    %v2298 = vpop.f32.mrf.mxu0
    %2299 = vdwg.mxu0
    %2300 = vst [vmem:[%s8] sm:$0xff] %v2286
    %2301 = vst [vmem:[%s8 + $0x8] sm:$0xff] %v2289
    %2302 = vst [vmem:[%s8 + $0x10] sm:$0xff] %v2294
    %2303 = vst [vmem:[%s8 + $0x18] sm:$0xff] %v2297
    // Predicated region
    $region38: #{gated_gcn_forward.1} parent=1 // pred_check
      _
    $region39: #{gated_gcn_forward.1} parent=1 // pred_check_branch
      %2305 = sbr.rel (0) target = $region41
    $region40: #{gated_gcn_forward.1} parent=1 // pred_region
      _
    $region41: #{gated_gcn_forward.1} parent=1 // pred_fallthru
      _
    // Predicated region
    $region42: #{gated_gcn_forward.1} parent=1 // pred_check
      _
    $region43: #{gated_gcn_forward.1} parent=1 // pred_check_branch
      %2307 = sbr.rel (0) target = $region45
    $region44: #{gated_gcn_forward.1} parent=1 // pred_region
      _
    $region45: #{gated_gcn_forward.1} parent=1 // pred_fallthru
      _
    %2308 = vsyncpa [#allocation3], 1

</llo_original>
